<compile_context>
chip_gen: v7x
topology: tpu7x:2x2x1
jax: 0.10.0
libtpu: 0.0.40
codegen_flags: <defaults>
</compile_context>

<pallas_src>
import functools
import math

import numpy as np
import jax
import jax.numpy as jnp
from jax import lax
from jax.experimental import pallas as pl
from jax.experimental.pallas import tpu as pltpu

EPS = 1e-5


# ---------------------------------------------------------------------------
# fused kernel: pass 0 = conv (tap matmul) + stats, pass 1 = GN + MLP + residual
# ---------------------------------------------------------------------------
def _down_block_kernel(phases_ref, w1_ref, gnw_ref, gnb_ref,
                       w2_ref, b2_ref, w3_ref, b3_ref,
                       out_ref, y_scr, stat_scr,
                       *, TR, Wo, C, inv_count, compute_dtype):
    # phases_ref: (1, 2, 2, Hh, Wh, C)   resident per sample (fetched once)
    # w1_ref:     (9C, 2C)               resident conv weight
    # y_scr:      (P, 2C) f32 VMEM       whole-sample conv output (resident)
    # stat_scr:   (2, 2C) f32 VMEM       per-channel [sum; sumsq] accumulator
    p = pl.program_id(1)
    t = pl.program_id(2)
    C2 = 2 * C
    TP = TR * Wo

    row0 = t * TP
    if TP % 8 == 0:
        row0 = pl.multiple_of(row0, 8)

    @pl.when(jnp.logical_and(p == 0, t == 0))
    def _init():
        stat_scr[...] = jnp.zeros_like(stat_scr)

    @pl.when(p == 0)
    def _conv_and_stats():
        r0 = t * TR
        taps = []
        for kh in range(3):
            for kw in range(3):
                tap = phases_ref[0, kh % 2, kw % 2,
                                 pl.ds(r0 + kh // 2, TR),
                                 pl.ds(kw // 2, Wo), :]           # (TR, Wo, C)
                taps.append(tap.reshape(TP, C))
        patch = jnp.concatenate(taps, axis=-1)                     # (TP, 9C)
        y = jnp.dot(patch, w1_ref[...],
                    preferred_element_type=jnp.float32)            # (TP, 2C) f32
        y_scr[pl.ds(row0, TP), :] = y
        stat_scr[...] += jnp.concatenate(
            [jnp.sum(y, axis=0, keepdims=True),
             jnp.sum(y * y, axis=0, keepdims=True)], axis=0)       # (2, 2C)

    @pl.when(p == 1)
    def _norm_mlp():
        st = stat_scr[...]                                         # (2, 2C) f32
        mean = jnp.sum(st[0:1, :]) * inv_count
        ex2 = jnp.sum(st[1:2, :]) * inv_count
        var = ex2 - mean * mean                                    # biased (PyTorch GN)
        inv_std = lax.rsqrt(var + EPS)

        y = y_scr[pl.ds(row0, TP), :]                              # (TP, 2C) f32
        yn = (y - mean) * inv_std * gnw_ref[...] + gnb_ref[...]    # per-channel affine

        h = jnp.dot(yn.astype(compute_dtype), w2_ref[...],
                    preferred_element_type=jnp.float32) + b2_ref[...]
        h = 0.5 * h * (1.0 + lax.erf(h * (1.0 / math.sqrt(2.0))))  # exact GELU (f32)
        z = jnp.dot(h.astype(compute_dtype), w3_ref[...],
                    preferred_element_type=jnp.float32) + b3_ref[...]

        out_ref[0] = (yn + z).astype(out_ref.dtype)


# ---------------------------------------------------------------------------
# device-derived VMEM budget + tile chooser
# ---------------------------------------------------------------------------
def _device_vmem_budget():
    cap = 64 << 20
    try:
        info = pltpu.get_tpu_info()
        cap = int(getattr(info, "vmem_capacity_bytes", cap))
    except Exception:
        pass
    # ~48 MiB on v7x (64 MiB VMEM/TC), ~96 MiB on v5e/v6e (128 MiB VMEM)
    return min(cap * 3 // 4, 112 << 20)


def _choose_tile_rows(Ho, Wo, C, itemsize, tile_budget):
    C2, C4 = 2 * C, 4 * C

    def tile_bytes(tr):
        tp = tr * Wo
        return (tp * 9 * C * max(itemsize, 4)    # patch build
                + 3 * tp * C2 * 4                # y / yn / z temporaries
                + 2 * tp * C4 * 4                # h + GELU temp
                + 2 * tp * C2 * 4)               # double-buffered output block

    cands = [tr for tr in range(Ho, 0, -1)
             if Ho % tr == 0 and ((tr * Wo) % 8 == 0 or tr == Ho)]
    for tr in cands:
        if tile_bytes(tr) <= tile_budget:
            return tr
    return cands[-1]


# ---------------------------------------------------------------------------
# wrapper
# ---------------------------------------------------------------------------
@functools.partial(jax.jit, static_argnames=("compute_dtype", "tile_rows"))
def down_block(x_nchw, w1, gn_w, gn_b, w2, b2, w3, b3,
               *, compute_dtype=jnp.bfloat16, tile_rows=None):
    """x_nchw: (N, C, H, W) f32.  Returns (N, 2C, H//2, W//2) f32."""
    N, C, H, W = x_nchw.shape
    C2, C4 = 2 * C, 4 * C
    Ho = (H - 1) // 2 + 1
    Wo = (W - 1) // 2 + 1
    P = Ho * Wo
    Hh, Wh = Ho + 1, Wo + 1
    itemsize = jnp.dtype(compute_dtype).itemsize

    # ---- device-derived VMEM plan ----
    vmem_limit = _device_vmem_budget()
    resident_bytes = (2 * 4 * Hh * Wh * C * itemsize                 # phases (2 bufs)
                      + P * C2 * 4                                   # y VMEM scratch
                      + 2 * (9 * C * C2 + 2 * C2 * C4 + 3 * C2 + C4) * 4
                      + 2 * C2 * 4)                                  # weights + stats
    tile_budget = vmem_limit - resident_bytes - (2 << 20)
    if tile_budget <= 0:
        # TODO(synk): streaming (HBM-resident y) fallback for very large H*W*C.
        raise ValueError("DownBlock sample does not fit the fused VMEM plan")

    if tile_rows is None:
        tile_rows = _choose_tile_rows(Ho, Wo, C, itemsize, tile_budget)
    if Ho % tile_rows != 0:
        raise ValueError(f"tile_rows={tile_rows} must divide Ho={Ho}")
    if (tile_rows * Wo) % 8 != 0 and tile_rows != Ho:
        raise ValueError("tile_rows*Wo must be a multiple of 8 (or tile_rows == Ho)")
    nt = Ho // tile_rows
    TP = tile_rows * Wo

    # ---- glue: NCHW -> padded NHWC -> 2x2 phase deinterleave (single pass) ----
    x = jnp.transpose(x_nchw, (0, 2, 3, 1))
    xp = jnp.pad(x, ((0, 0), (1, 2 * Hh - H - 1), (1, 2 * Wh - W - 1), (0, 0)))
    phases = xp.reshape(N, Hh, 2, Wh, 2, C).transpose(0, 2, 4, 1, 3, 5)
    phases = phases.astype(compute_dtype)                    # (N, 2, 2, Hh, Wh, C)

    # ---- weights in matmul layout; MXU operands in compute_dtype ----
    w1m = jnp.transpose(w1, (2, 3, 1, 0)).reshape(9 * C, C2).astype(compute_dtype)
    w2m = jnp.transpose(w2.reshape(C4, C2)).astype(compute_dtype)    # (2C, 4C)
    w3m = jnp.transpose(w3.reshape(C2, C4)).astype(compute_dtype)    # (4C, 2C)

    kern = functools.partial(_down_block_kernel,
                             TR=tile_rows, Wo=Wo, C=C,
                             inv_count=1.0 / float(P * C2),
                             compute_dtype=compute_dtype)

    const2 = lambda n, p, t: (0, 0)
    out = pl.pallas_call(
        kern,
        out_shape=jax.ShapeDtypeStruct((N, P, C2), jnp.float32),
        grid=(N, 2, nt),
        in_specs=[
            pl.BlockSpec((1, 2, 2, Hh, Wh, C), lambda n, p, t: (n, 0, 0, 0, 0, 0)),
            pl.BlockSpec((9 * C, C2), const2),
            pl.BlockSpec((1, C2), const2),
            pl.BlockSpec((1, C2), const2),
            pl.BlockSpec((C2, C4), const2),
            pl.BlockSpec((1, C4), const2),
            pl.BlockSpec((C4, C2), const2),
            pl.BlockSpec((1, C2), const2),
        ],
        # pass 0 aliases block (n, 0); it is only flushed once pass 1 fills it,
        # so every output block is DMA'd to HBM exactly once.
        out_specs=pl.BlockSpec((1, TP, C2), lambda n, p, t: (n, p * t, 0)),
        scratch_shapes=[pltpu.VMEM((P, C2), jnp.float32),
                        pltpu.VMEM((2, C2), jnp.float32)],
        compiler_params=pltpu.CompilerParams(
            dimension_semantics=("parallel", "arbitrary", "arbitrary"),
            vmem_limit_bytes=vmem_limit),
    )(phases, w1m, gn_w.reshape(1, C2), gn_b.reshape(1, C2),
      w2m, b2.reshape(1, C4), w3m, b3.reshape(1, C2))

    # (N, P, 2C) -> NCHW
    return jnp.transpose(out.reshape(N, Ho, Wo, C2), (0, 3, 1, 2))


# ---------------------------------------------------------------------------
# pure-JAX reference (mirrors the PyTorch module, NCHW, f32)
# ---------------------------------------------------------------------------
def ref_forward(x, w1, gn_w, gn_b, w2, b2, w3, b3):
    y = lax.conv_general_dilated(x, w1, window_strides=(2, 2),
                                 padding=((1, 1), (1, 1)),
                                 dimension_numbers=("NCHW", "OIHW", "NCHW"))
    mean = y.mean(axis=(1, 2, 3), keepdims=True)
    var = ((y - mean) ** 2).mean(axis=(1, 2, 3), keepdims=True)
    yn = (y - mean) / jnp.sqrt(var + EPS)
    yn = yn * gn_w[None, :, None, None] + gn_b[None, :, None, None]
    C2, C4 = w2.shape[1], w2.shape[0]
    h = jnp.einsum("nchw,oc->nohw", yn, w2.reshape(C4, C2)) + b2[None, :, None, None]
    h = 0.5 * h * (1.0 + lax.erf(h / math.sqrt(2.0)))
    z = jnp.einsum("nchw,oc->nohw", h, w3.reshape(C2, C4)) + b3[None, :, None, None]
    return yn + z


if __name__ == "__main__":
    N, C, H, W = 2, 4, 16, 16
    C2, C4 = 2 * C, 4 * C

    key = jax.random.PRNGKey(0)
    ks = jax.random.split(key, 8)

    x = jax.random.normal(ks[0], (N, C, H, W), jnp.float32)

    # deterministic synthetic parameters (shapes match nn.Module.__init__)
    w1 = jax.random.normal(ks[1], (C2, C, 3, 3), jnp.float32) * (1.0 / math.sqrt(9 * C))
    gn_w = 1.0 + 0.1 * jax.random.normal(ks[2], (C2,), jnp.float32)
    gn_b = 0.1 * jax.random.normal(ks[3], (C2,), jnp.float32)
    w2 = jax.random.normal(ks[4], (C4, C2, 1, 1), jnp.float32) * (1.0 / math.sqrt(C2))
    b2 = 0.1 * jax.random.normal(ks[5], (C4,), jnp.float32)
    w3 = jax.random.normal(ks[6], (C2, C4, 1, 1), jnp.float32) * (1.0 / math.sqrt(C4))
    b3 = 0.1 * jax.random.normal(ks[7], (C2,), jnp.float32)

    ref = jax.block_until_ready(ref_forward(x, w1, gn_w, gn_b, w2, b2, w3, b3))

    # 1) exact f32 MXU-operand path, auto tile (single tile per sample)
    out_f32 = jax.block_until_ready(
        down_block(x, w1, gn_w, gn_b, w2, b2, w3, b3,
                   compute_dtype=jnp.float32, tile_rows=None))
    np.testing.assert_allclose(np.asarray(out_f32), np.asarray(ref),
                               rtol=1e-4, atol=1e-4)

    # 2) exact f32 path with a forced small tile (nt=4) -> exercises the
    #    two-pass, cross-tile GroupNorm statistics accumulation
    out_f32_tiled = jax.block_until_ready(
        down_block(x, w1, gn_w, gn_b, w2, b2, w3, b3,
                   compute_dtype=jnp.float32, tile_rows=2))
    np.testing.assert_allclose(np.asarray(out_f32_tiled), np.asarray(ref),
                               rtol=1e-4, atol=1e-4)

    # 3) default bf16 MXU-operand path (f32 accumulation / stats / GELU)
    out_bf16 = jax.block_until_ready(
        down_block(x, w1, gn_w, gn_b, w2, b2, w3, b3,
                   compute_dtype=jnp.bfloat16, tile_rows=None))
    np.testing.assert_allclose(np.asarray(out_bf16), np.asarray(ref),
                               rtol=1e-1, atol=1e-1)

    print("KERNEL_OK")
</pallas_src>

<mosaic_0001>
module attributes {stable_mosaic.version = 11 : i64} {
  func.func @_down_block_kernel(%arg0: i32, %arg1: i32, %arg2: i32, %arg3: memref<1x2x2x9x9x4xf32, #tpu.memory_space<vmem>>, %arg4: memref<36x8xf32, #tpu.memory_space<vmem>>, %arg5: memref<1x8xf32, #tpu.memory_space<vmem>>, %arg6: memref<1x8xf32, #tpu.memory_space<vmem>>, %arg7: memref<8x16xf32, #tpu.memory_space<vmem>>, %arg8: memref<1x16xf32, #tpu.memory_space<vmem>>, %arg9: memref<16x8xf32, #tpu.memory_space<vmem>>, %arg10: memref<1x8xf32, #tpu.memory_space<vmem>>, %arg11: memref<1x64x8xf32, #tpu.memory_space<vmem>>, %arg12: memref<64x8xf32, #tpu.memory_space<vmem>>, %arg13: memref<2x8xf32, #tpu.memory_space<vmem>>) attributes {dimension_semantics = [#tpu.dimension_semantics<parallel>, #tpu.dimension_semantics<arbitrary>, #tpu.dimension_semantics<arbitrary>], iteration_bounds = array<i64: 2, 2, 1>, scalar_prefetch = 0 : i64, scratch_operands = 2 : i64, tpu.core_type = #tpu.core_type<tc>, window_params = [{transform_indices = @transform_0, window_bounds = array<i64: 1, 2, 2, 9, 9, 4>}, {pipeline_mode = #tpu.pipeline_mode<synchronous>, transform_indices = @transform_1, window_bounds = array<i64: 36, 8>}, {pipeline_mode = #tpu.pipeline_mode<synchronous>, transform_indices = @transform_2, window_bounds = array<i64: 1, 8>}, {pipeline_mode = #tpu.pipeline_mode<synchronous>, transform_indices = @transform_3, window_bounds = array<i64: 1, 8>}, {pipeline_mode = #tpu.pipeline_mode<synchronous>, transform_indices = @transform_4, window_bounds = array<i64: 8, 16>}, {pipeline_mode = #tpu.pipeline_mode<synchronous>, transform_indices = @transform_5, window_bounds = array<i64: 1, 16>}, {pipeline_mode = #tpu.pipeline_mode<synchronous>, transform_indices = @transform_6, window_bounds = array<i64: 16, 8>}, {pipeline_mode = #tpu.pipeline_mode<synchronous>, transform_indices = @transform_7, window_bounds = array<i64: 1, 8>}, {transform_indices = @transform_8, window_bounds = array<i64: 1, 64, 8>}]} {
    %c64_i32 = arith.constant 64 : i32
    %0 = arith.muli %arg2, %c64_i32 : i32
    %1 = tpu.assume_multiple %0, 8 : i32
    %c0_i32 = arith.constant 0 : i32
    %2 = arith.cmpi eq, %arg1, %c0_i32 : i32
    %c0_i32_0 = arith.constant 0 : i32
    %3 = arith.cmpi eq, %arg2, %c0_i32_0 : i32
    %4 = arith.andi %2, %3 : i1
    %5 = arith.extui %4 : i1 to i32
    %c0_i32_1 = arith.constant 0 : i32
    %6 = arith.cmpi ne, %5, %c0_i32_1 : i32
    scf.if %6 {
      %cst = arith.constant 0.000000e+00 : f32
      %13 = vector.broadcast %cst : f32 to vector<2x8xf32>
      %c0 = arith.constant 0 : index
      %c0_5 = arith.constant 0 : index
      %14 = vector.load %arg13[%c0, %c0_5] : memref<2x8xf32, #tpu.memory_space<vmem>>, vector<2x8xf32>
      tpu.vector_store %arg13[%c0, %c0_5], %13 {strides = array<i32>} : memref<2x8xf32, #tpu.memory_space<vmem>>, vector<2x8xf32>,
    } else {
    }
    %c0_i32_2 = arith.constant 0 : i32
    %7 = arith.cmpi eq, %arg1, %c0_i32_2 : i32
    %8 = arith.extui %7 : i1 to i32
    %c0_i32_3 = arith.constant 0 : i32
    %9 = arith.cmpi ne, %8, %c0_i32_3 : i32
    scf.if %9 {
      %c8_i32 = arith.constant 8 : i32
      %13 = arith.muli %arg2, %c8_i32 : i32
      %c0_i32_5 = arith.constant 0 : i32
      %14 = arith.addi %13, %c0_i32_5 : i32
      %c0 = arith.constant 0 : index
      %c0_6 = arith.constant 0 : index
      %c0_7 = arith.constant 0 : index
      %15 = arith.index_cast %14 : i32 to index
      %c0_8 = arith.constant 0 : index
      %c0_9 = arith.constant 0 : index
      %16 = vector.load %arg3[%c0, %c0_6, %c0_7, %15, %c0_8, %c0_9] : memref<1x2x2x9x9x4xf32, #tpu.memory_space<vmem>>, vector<1x1x1x8x8x4xf32>
      %17 = vector.shape_cast %16 : vector<1x1x1x8x8x4xf32> to vector<8x8x4xf32>
      %18 = vector.shape_cast %17 : vector<8x8x4xf32> to vector<64x4xf32>
      %c0_i32_10 = arith.constant 0 : i32
      %19 = arith.addi %13, %c0_i32_10 : i32
      %c0_11 = arith.constant 0 : index
      %c0_12 = arith.constant 0 : index
      %c1 = arith.constant 1 : index
      %20 = arith.index_cast %19 : i32 to index
      %c0_13 = arith.constant 0 : index
      %c0_14 = arith.constant 0 : index
      %21 = vector.load %arg3[%c0_11, %c0_12, %c1, %20, %c0_13, %c0_14] : memref<1x2x2x9x9x4xf32, #tpu.memory_space<vmem>>, vector<1x1x1x8x8x4xf32>
      %22 = vector.shape_cast %21 : vector<1x1x1x8x8x4xf32> to vector<8x8x4xf32>
      %23 = vector.shape_cast %22 : vector<8x8x4xf32> to vector<64x4xf32>
      %c0_i32_15 = arith.constant 0 : i32
      %24 = arith.addi %13, %c0_i32_15 : i32
      %c0_16 = arith.constant 0 : index
      %c0_17 = arith.constant 0 : index
      %c0_18 = arith.constant 0 : index
      %25 = arith.index_cast %24 : i32 to index
      %c1_19 = arith.constant 1 : index
      %c0_20 = arith.constant 0 : index
      %26 = vector.load %arg3[%c0_16, %c0_17, %c0_18, %25, %c1_19, %c0_20] : memref<1x2x2x9x9x4xf32, #tpu.memory_space<vmem>>, vector<1x1x1x8x8x4xf32>
      %27 = vector.shape_cast %26 : vector<1x1x1x8x8x4xf32> to vector<8x8x4xf32>
      %28 = vector.shape_cast %27 : vector<8x8x4xf32> to vector<64x4xf32>
      %c0_i32_21 = arith.constant 0 : i32
      %29 = arith.addi %13, %c0_i32_21 : i32
      %c0_22 = arith.constant 0 : index
      %c1_23 = arith.constant 1 : index
      %c0_24 = arith.constant 0 : index
      %30 = arith.index_cast %29 : i32 to index
      %c0_25 = arith.constant 0 : index
      %c0_26 = arith.constant 0 : index
      %31 = vector.load %arg3[%c0_22, %c1_23, %c0_24, %30, %c0_25, %c0_26] : memref<1x2x2x9x9x4xf32, #tpu.memory_space<vmem>>, vector<1x1x1x8x8x4xf32>
      %32 = vector.shape_cast %31 : vector<1x1x1x8x8x4xf32> to vector<8x8x4xf32>
      %33 = vector.shape_cast %32 : vector<8x8x4xf32> to vector<64x4xf32>
      %c0_i32_27 = arith.constant 0 : i32
      %34 = arith.addi %13, %c0_i32_27 : i32
      %c0_28 = arith.constant 0 : index
      %c1_29 = arith.constant 1 : index
      %c1_30 = arith.constant 1 : index
      %35 = arith.index_cast %34 : i32 to index
      %c0_31 = arith.constant 0 : index
      %c0_32 = arith.constant 0 : index
      %36 = vector.load %arg3[%c0_28, %c1_29, %c1_30, %35, %c0_31, %c0_32] : memref<1x2x2x9x9x4xf32, #tpu.memory_space<vmem>>, vector<1x1x1x8x8x4xf32>
      %37 = vector.shape_cast %36 : vector<1x1x1x8x8x4xf32> to vector<8x8x4xf32>
      %38 = vector.shape_cast %37 : vector<8x8x4xf32> to vector<64x4xf32>
      %c0_i32_33 = arith.constant 0 : i32
      %39 = arith.addi %13, %c0_i32_33 : i32
      %c0_34 = arith.constant 0 : index
      %c1_35 = arith.constant 1 : index
      %c0_36 = arith.constant 0 : index
      %40 = arith.index_cast %39 : i32 to index
      %c1_37 = arith.constant 1 : index
      %c0_38 = arith.constant 0 : index
      %41 = vector.load %arg3[%c0_34, %c1_35, %c0_36, %40, %c1_37, %c0_38] : memref<1x2x2x9x9x4xf32, #tpu.memory_space<vmem>>, vector<1x1x1x8x8x4xf32>
      %42 = vector.shape_cast %41 : vector<1x1x1x8x8x4xf32> to vector<8x8x4xf32>
      %43 = vector.shape_cast %42 : vector<8x8x4xf32> to vector<64x4xf32>
      %c1_i32_39 = arith.constant 1 : i32
      %44 = arith.addi %13, %c1_i32_39 : i32
      %c0_40 = arith.constant 0 : index
      %c0_41 = arith.constant 0 : index
      %c0_42 = arith.constant 0 : index
      %45 = arith.index_cast %44 : i32 to index
      %c0_43 = arith.constant 0 : index
      %c0_44 = arith.constant 0 : index
      %46 = vector.load %arg3[%c0_40, %c0_41, %c0_42, %45, %c0_43, %c0_44] : memref<1x2x2x9x9x4xf32, #tpu.memory_space<vmem>>, vector<1x1x1x8x8x4xf32>
      %47 = vector.shape_cast %46 : vector<1x1x1x8x8x4xf32> to vector<8x8x4xf32>
      %48 = vector.shape_cast %47 : vector<8x8x4xf32> to vector<64x4xf32>
      %c1_i32_45 = arith.constant 1 : i32
      %49 = arith.addi %13, %c1_i32_45 : i32
      %c0_46 = arith.constant 0 : index
      %c0_47 = arith.constant 0 : index
      %c1_48 = arith.constant 1 : index
      %50 = arith.index_cast %49 : i32 to index
      %c0_49 = arith.constant 0 : index
      %c0_50 = arith.constant 0 : index
      %51 = vector.load %arg3[%c0_46, %c0_47, %c1_48, %50, %c0_49, %c0_50] : memref<1x2x2x9x9x4xf32, #tpu.memory_space<vmem>>, vector<1x1x1x8x8x4xf32>
      %52 = vector.shape_cast %51 : vector<1x1x1x8x8x4xf32> to vector<8x8x4xf32>
      %53 = vector.shape_cast %52 : vector<8x8x4xf32> to vector<64x4xf32>
      %c1_i32_51 = arith.constant 1 : i32
      %54 = arith.addi %13, %c1_i32_51 : i32
      %c0_52 = arith.constant 0 : index
      %c0_53 = arith.constant 0 : index
      %c0_54 = arith.constant 0 : index
      %55 = arith.index_cast %54 : i32 to index
      %c1_55 = arith.constant 1 : index
      %c0_56 = arith.constant 0 : index
      %56 = vector.load %arg3[%c0_52, %c0_53, %c0_54, %55, %c1_55, %c0_56] : memref<1x2x2x9x9x4xf32, #tpu.memory_space<vmem>>, vector<1x1x1x8x8x4xf32>
      %57 = vector.shape_cast %56 : vector<1x1x1x8x8x4xf32> to vector<8x8x4xf32>
      %58 = vector.shape_cast %57 : vector<8x8x4xf32> to vector<64x4xf32>
      %59 = tpu.concatenate %18, %23, %28, %33, %38, %43, %48, %53, %58 in 1 : vector<64x4xf32>, vector<64x4xf32>, vector<64x4xf32>, vector<64x4xf32>, vector<64x4xf32>, vector<64x4xf32>, vector<64x4xf32>, vector<64x4xf32>, vector<64x4xf32> -> vector<64x36xf32>
      %c0_57 = arith.constant 0 : index
      %c0_58 = arith.constant 0 : index
      %60 = vector.load %arg4[%c0_57, %c0_58] : memref<36x8xf32, #tpu.memory_space<vmem>>, vector<36x8xf32>
      %cst = arith.constant dense<0.000000e+00> : vector<64x8xf32>
      %61 = tpu.matmul %59, %60, %cst {dimension_numbers = #tpu.dot_dimension_numbers<[1], [0], [0], [1], [0, 0, 1, 1], [], []>} : vector<64x36xf32>, vector<36x8xf32>, vector<64x8xf32> -> vector<64x8xf32>
      %62 = arith.index_cast %1 : i32 to index
      %c0_59 = arith.constant 0 : index
      %63 = vector.load %arg12[%62, %c0_59] : memref<64x8xf32, #tpu.memory_space<vmem>>, vector<64x8xf32>
      tpu.vector_store %arg12[%62, %c0_59], %61 {strides = array<i32>} : memref<64x8xf32, #tpu.memory_space<vmem>>, vector<64x8xf32>,
      %c0_60 = arith.constant 0 : index
      %c0_61 = arith.constant 0 : index
      %64 = vector.load %arg13[%c0_60, %c0_61] : memref<2x8xf32, #tpu.memory_space<vmem>>, vector<2x8xf32>
      %cst_62 = arith.constant dense<0.000000e+00> : vector<8xf32>
      %65 = vector.multi_reduction <add>, %61, %cst_62 [0] : vector<64x8xf32> to vector<8xf32>
      %66 = vector.shape_cast %65 : vector<8xf32> to vector<1x8xf32>
      %67 = arith.mulf %61, %61 : vector<64x8xf32>
      %cst_63 = arith.constant dense<0.000000e+00> : vector<8xf32>
      %68 = vector.multi_reduction <add>, %67, %cst_63 [0] : vector<64x8xf32> to vector<8xf32>
      %69 = vector.shape_cast %68 : vector<8xf32> to vector<1x8xf32>
      %70 = tpu.concatenate %66, %69 in 0 : vector<1x8xf32>, vector<1x8xf32> -> vector<2x8xf32>
      %71 = arith.addf %64, %70 : vector<2x8xf32>
      %c0_64 = arith.constant 0 : index
      %c0_65 = arith.constant 0 : index
      %72 = vector.load %arg13[%c0_64, %c0_65] : memref<2x8xf32, #tpu.memory_space<vmem>>, vector<2x8xf32>
      tpu.vector_store %arg13[%c0_64, %c0_65], %71 {strides = array<i32>} : memref<2x8xf32, #tpu.memory_space<vmem>>, vector<2x8xf32>,
    } else {
    }
    %c1_i32 = arith.constant 1 : i32
    %10 = arith.cmpi eq, %arg1, %c1_i32 : i32
    %11 = arith.extui %10 : i1 to i32
    %c0_i32_4 = arith.constant 0 : i32
    %12 = arith.cmpi ne, %11, %c0_i32_4 : i32
    scf.if %12 {
      %c0 = arith.constant 0 : index
      %c0_5 = arith.constant 0 : index
      %13 = vector.load %arg13[%c0, %c0_5] : memref<2x8xf32, #tpu.memory_space<vmem>>, vector<2x8xf32>
      %14 = vector.extract_strided_slice %13 {offsets = [0, 0], sizes = [1, 8], strides = [1, 1]} : vector<2x8xf32> to vector<1x8xf32>
      %15 = vector.shape_cast %14 : vector<1x8xf32> to vector<1x1x8xf32>
      %cst = arith.constant dense<0.000000e+00> : vector<1xf32>
      %16 = vector.multi_reduction <add>, %15, %cst [1, 2] : vector<1x1x8xf32> to vector<1xf32>
      %17 = vector.shape_cast %16 : vector<1xf32> to vector<1x1x1xf32>
      %18 = vector.extract %17[0, 0, 0] : f32 from vector<1x1x1xf32>
      %cst_6 = arith.constant 0.001953125 : f32
      %19 = arith.mulf %18, %cst_6 : f32
      %20 = vector.extract_strided_slice %13 {offsets = [1, 0], sizes = [1, 8], strides = [1, 1]} : vector<2x8xf32> to vector<1x8xf32>
      %21 = vector.shape_cast %20 : vector<1x8xf32> to vector<1x1x8xf32>
      %cst_7 = arith.constant dense<0.000000e+00> : vector<1xf32>
      %22 = vector.multi_reduction <add>, %21, %cst_7 [1, 2] : vector<1x1x8xf32> to vector<1xf32>
      %23 = vector.shape_cast %22 : vector<1xf32> to vector<1x1x1xf32>
      %24 = vector.extract %23[0, 0, 0] : f32 from vector<1x1x1xf32>
      %cst_8 = arith.constant 0.001953125 : f32
      %25 = arith.mulf %24, %cst_8 : f32
      %26 = arith.mulf %19, %19 : f32
      %27 = arith.subf %25, %26 : f32
      %cst_9 = arith.constant 9.99999974E-6 : f32
      %28 = arith.addf %27, %cst_9 : f32
      %29 = math.rsqrt %28 : f32
      %30 = arith.index_cast %1 : i32 to index
      %c0_10 = arith.constant 0 : index
      %31 = vector.load %arg12[%30, %c0_10] : memref<64x8xf32, #tpu.memory_space<vmem>>, vector<64x8xf32>
      %32 = vector.broadcast %19 : f32 to vector<64x8xf32>
      %33 = arith.subf %31, %32 : vector<64x8xf32>
      %34 = vector.broadcast %29 : f32 to vector<64x8xf32>
      %35 = arith.mulf %33, %34 : vector<64x8xf32>
      %c0_11 = arith.constant 0 : index
      %c0_12 = arith.constant 0 : index
      %36 = vector.load %arg5[%c0_11, %c0_12] : memref<1x8xf32, #tpu.memory_space<vmem>>, vector<1x8xf32>
      %37 = vector.broadcast %36 : vector<1x8xf32> to vector<64x8xf32>
      %38 = arith.mulf %35, %37 : vector<64x8xf32>
      %c0_13 = arith.constant 0 : index
      %c0_14 = arith.constant 0 : index
      %39 = vector.load %arg6[%c0_13, %c0_14] : memref<1x8xf32, #tpu.memory_space<vmem>>, vector<1x8xf32>
      %40 = vector.broadcast %39 : vector<1x8xf32> to vector<64x8xf32>
      %41 = arith.addf %38, %40 : vector<64x8xf32>
      %c0_15 = arith.constant 0 : index
      %c0_16 = arith.constant 0 : index
      %42 = vector.load %arg7[%c0_15, %c0_16] : memref<8x16xf32, #tpu.memory_space<vmem>>, vector<8x16xf32>
      %cst_17 = arith.constant dense<0.000000e+00> : vector<64x16xf32>
      %43 = tpu.matmul %41, %42, %cst_17 {dimension_numbers = #tpu.dot_dimension_numbers<[1], [0], [0], [1], [0, 0, 1, 1], [], []>} : vector<64x8xf32>, vector<8x16xf32>, vector<64x16xf32> -> vector<64x16xf32>
      %c0_18 = arith.constant 0 : index
      %c0_19 = arith.constant 0 : index
      %44 = vector.load %arg8[%c0_18, %c0_19] : memref<1x16xf32, #tpu.memory_space<vmem>>, vector<1x16xf32>
      %45 = vector.broadcast %44 : vector<1x16xf32> to vector<64x16xf32>
      %46 = arith.addf %43, %45 : vector<64x16xf32>
      %cst_20 = arith.constant 5.000000e-01 : f32
      %47 = vector.broadcast %cst_20 : f32 to vector<64x16xf32>
      %48 = arith.mulf %47, %46 : vector<64x16xf32>
      %cst_21 = arith.constant 0.707106769 : f32
      %49 = vector.broadcast %cst_21 : f32 to vector<64x16xf32>
      %50 = arith.mulf %46, %49 : vector<64x16xf32>
      %51 = math.erf %50 : vector<64x16xf32>
      %cst_22 = arith.constant 1.000000e+00 : f32
      %52 = vector.broadcast %cst_22 : f32 to vector<64x16xf32>
      %53 = arith.addf %52, %51 : vector<64x16xf32>
      %54 = arith.mulf %48, %53 : vector<64x16xf32>
      %c0_23 = arith.constant 0 : index
      %c0_24 = arith.constant 0 : index
      %55 = vector.load %arg9[%c0_23, %c0_24] : memref<16x8xf32, #tpu.memory_space<vmem>>, vector<16x8xf32>
      %cst_25 = arith.constant dense<0.000000e+00> : vector<64x8xf32>
      %56 = tpu.matmul %54, %55, %cst_25 {dimension_numbers = #tpu.dot_dimension_numbers<[1], [0], [0], [1], [0, 0, 1, 1], [], []>} : vector<64x16xf32>, vector<16x8xf32>, vector<64x8xf32> -> vector<64x8xf32>
      %c0_26 = arith.constant 0 : index
      %c0_27 = arith.constant 0 : index
      %57 = vector.load %arg10[%c0_26, %c0_27] : memref<1x8xf32, #tpu.memory_space<vmem>>, vector<1x8xf32>
      %58 = vector.broadcast %57 : vector<1x8xf32> to vector<64x8xf32>
      %59 = arith.addf %56, %58 : vector<64x8xf32>
      %60 = arith.addf %41, %59 : vector<64x8xf32>
      %c0_28 = arith.constant 0 : index
      %c0_29 = arith.constant 0 : index
      %c0_30 = arith.constant 0 : index
      %61 = vector.load %arg11[%c0_28, %c0_29, %c0_30] : memref<1x64x8xf32, #tpu.memory_space<vmem>>, vector<1x64x8xf32>
      %62 = vector.shape_cast %61 : vector<1x64x8xf32> to vector<64x8xf32>
      %63 = vector.shape_cast %60 : vector<64x8xf32> to vector<1x64x8xf32>
      tpu.vector_store %arg11[%c0_28, %c0_29, %c0_30], %63 {strides = array<i32>} : memref<1x64x8xf32, #tpu.memory_space<vmem>>, vector<1x64x8xf32>,
    } else {
    }
    return
  }
  func.func @transform_0(%arg0: i32, %arg1: i32, %arg2: i32) -> (i32, i32, i32, i32, i32, i32) {
    %c0_i32 = arith.constant 0 : i32
    %c0_i32_0 = arith.constant 0 : i32
    %c0_i32_1 = arith.constant 0 : i32
    %c0_i32_2 = arith.constant 0 : i32
    %c0_i32_3 = arith.constant 0 : i32
    %c0_i32_4 = arith.constant 0 : i32
    return %arg0, %c0_i32, %c0_i32_0, %c0_i32_1, %c0_i32_2, %c0_i32_3 : i32, i32, i32, i32, i32, i32
  }
  func.func @transform_1(%arg0: i32, %arg1: i32, %arg2: i32) -> (i32, i32) {
    %c0_i32 = arith.constant 0 : i32
    %c0_i32_0 = arith.constant 0 : i32
    %c0_i32_1 = arith.constant 0 : i32
    return %c0_i32, %c0_i32_0 : i32, i32
  }
  func.func @transform_2(%arg0: i32, %arg1: i32, %arg2: i32) -> (i32, i32) {
    %c0_i32 = arith.constant 0 : i32
    %c0_i32_0 = arith.constant 0 : i32
    %c0_i32_1 = arith.constant 0 : i32
    return %c0_i32, %c0_i32_0 : i32, i32
  }
  func.func @transform_3(%arg0: i32, %arg1: i32, %arg2: i32) -> (i32, i32) {
    %c0_i32 = arith.constant 0 : i32
    %c0_i32_0 = arith.constant 0 : i32
    %c0_i32_1 = arith.constant 0 : i32
    return %c0_i32, %c0_i32_0 : i32, i32
  }
  func.func @transform_4(%arg0: i32, %arg1: i32, %arg2: i32) -> (i32, i32) {
    %c0_i32 = arith.constant 0 : i32
    %c0_i32_0 = arith.constant 0 : i32
    %c0_i32_1 = arith.constant 0 : i32
    return %c0_i32, %c0_i32_0 : i32, i32
  }
  func.func @transform_5(%arg0: i32, %arg1: i32, %arg2: i32) -> (i32, i32) {
    %c0_i32 = arith.constant 0 : i32
    %c0_i32_0 = arith.constant 0 : i32
    %c0_i32_1 = arith.constant 0 : i32
    return %c0_i32, %c0_i32_0 : i32, i32
  }
  func.func @transform_6(%arg0: i32, %arg1: i32, %arg2: i32) -> (i32, i32) {
    %c0_i32 = arith.constant 0 : i32
    %c0_i32_0 = arith.constant 0 : i32
    %c0_i32_1 = arith.constant 0 : i32
    return %c0_i32, %c0_i32_0 : i32, i32
  }
  func.func @transform_7(%arg0: i32, %arg1: i32, %arg2: i32) -> (i32, i32) {
    %c0_i32 = arith.constant 0 : i32
    %c0_i32_0 = arith.constant 0 : i32
    %c0_i32_1 = arith.constant 0 : i32
    return %c0_i32, %c0_i32_0 : i32, i32
  }
  func.func @transform_8(%arg0: i32, %arg1: i32, %arg2: i32) -> (i32, i32, i32) {
    %0 = arith.muli %arg1, %arg2 : i32
    %c0_i32 = arith.constant 0 : i32
    %c0_i32_0 = arith.constant 0 : i32
    return %arg0, %0, %c0_i32 : i32, i32, i32
  }
}

</mosaic_0001>

<llo_original>
// kernel: down_block.1
$region0: #{down_block.1}
  #allocation0 [shape = 'u32[]', space=smem, size = 0x4, offset = 0x4, fixed_abs, tag = 'smem constant byte address 0x4 - core index']
  #allocation1 [shape = 'u32[144,128]{1,0:T(1,128)}', space=vmem, size = 0x12000, scoped, tag = 'internal scratch']
  #allocation2 [shape = 'f32[64,8]{1,0:T(8,128)}', space=vmem, size = 0x8000, scoped, tag = 'scratch operand']
  #allocation3 [shape = 'f32[2,8]{1,0:T(2,128)}', space=vmem, size = 0x400, scoped, tag = 'scratch operand']
  %s0 = inlined_call_operand.vmem [shape: f32[2,2,2,9,9,4], index: 0, kind: input, shape index: {}]
  %s1 = inlined_call_operand.vmem [shape: f32[36,8], index: 1, kind: input, shape index: {}]
  %s2 = inlined_call_operand.vmem [shape: f32[1,8], index: 2, kind: input, shape index: {}]
  %s3 = inlined_call_operand.vmem [shape: f32[1,8], index: 3, kind: input, shape index: {}]
  %s4 = inlined_call_operand.vmem [shape: f32[8,16], index: 4, kind: input, shape index: {}]
  %s5 = inlined_call_operand.vmem [shape: f32[1,16], index: 5, kind: input, shape index: {}]
  %s6 = inlined_call_operand.vmem [shape: f32[16,8], index: 6, kind: input, shape index: {}]
  %s7 = inlined_call_operand.vmem [shape: f32[1,8], index: 7, kind: input, shape index: {}]
  %s8 = inlined_call_operand.vmem [shape: f32[2,64,8], index: 8, kind: output, shape index: {}]
  %s9 = sld [smem:[#allocation0]]
  $region77: #{down_block.1} parent=0
    _
  %s11 = ssub.s32 1, %s9
  %s12 = scalar_select 0, %s11, %s9
  loop: start=0, step=1, limit=6
  $region2: #{down_block.1} parent=0 // loop_pre_header
    _
  $region3: #{down_block.1} parent=0 // loop_header
    %s14 = sphi 0, %s18
    %p15 = scmp.ge.s32.totalorder %s14, 6
    %s21 = sphi 0, %s40
    %s22 = sphi 0, %s36
    %s23 = sphi 0, %s32
    %s24 = sphi 0, %s21
    %s25 = sphi 0, %s22
    %s26 = sphi 0, %s23
    %s27 = sphi 0, %s24
    %s28 = sphi 0, %s25
    %s29 = sphi 0, %s26
    %s43 = sphi 0, %s45
    %s46 = sphi 0, %s43
    %s47 = sphi 0, %s46
    %s63 = sphi 0, %s47
    %s67 = sphi 0, %s67
    %s69 = sphi 0, %s67
    %s70 = sphi 0, %s69
    %s84 = sphi 0, %s70
    %s88 = sphi 0, %s88
    %s90 = sphi 0, %s88
    %s91 = sphi 0, %s90
    %s105 = sphi 0, %s91
    %s109 = sphi 0, %s109
    %s111 = sphi 0, %s109
    %s112 = sphi 0, %s111
    %s126 = sphi 0, %s112
    %s130 = sphi 0, %s130
    %s132 = sphi 0, %s130
    %s133 = sphi 0, %s132
    %s147 = sphi 0, %s133
    %s151 = sphi 0, %s151
    %s153 = sphi 0, %s151
    %s154 = sphi 0, %s153
    %s168 = sphi 0, %s154
    %s172 = sphi 0, %s172
    %s174 = sphi 0, %s172
    %s175 = sphi 0, %s174
    %s189 = sphi 0, %s175
    %s193 = sphi 0, %s193
    %s195 = sphi 0, %s193
    %s196 = sphi 0, %s195
    %s210 = sphi 0, %s196
    %s220 = sphi 0, %s222
    %s223 = sphi 0, %s220
    %s224 = sphi 0, %s223
    %s240 = sphi 0, %s224
  $region4: #{down_block.1} parent=0 // loop_header_branch
    %17 = sbr.rel (%p15) target = $region8
  $region5: #{down_block.1} parent=0 // loop_body
    %s19 = ssub.s32 %s14, 1
    %s20 = ssub.s32 %s14, 2
    %s30 = sadd.s32 1, %s23
    %p31 = scmp.ge.s32.totalorder %s30, 1
    %s32 = scalar_select %p31, 0, %s30
    %s33 = sadd.s32 1, %s22
    %s34 = scalar_select %p31, %s33, %s22
    %p35 = scmp.ge.s32.totalorder %s34, 2
    %s36 = scalar_select %p35, 0, %s34
    %s37 = sadd.s32 1, %s21
    %s38 = scalar_select %p35, %s37, %s21
    %p39 = scmp.ge.s32.totalorder %s38, 2
    %s40 = scalar_select %p39, 0, %s38
    %s41 = ssub.s32 %s21, %s40
    %p42 = scmp.eq.s32.totalorder %s41, 0
    %s44 = sadd.s32 %s43, 1
    %s45 = scalar_select %p42, %s43, %s44
    %p48 = pneg %p42
    %p49 = scmp.eq.s32.totalorder %s14, 3
    %p50 = por %p48, %p49
    %p51 = scmp.ne.s32.totalorder %s43, %s46
    %p52 = scmp.eq.s32.totalorder %s14, 0
    %p53 = por %p51, %p52
    %p54 = scmp.ne.s32.totalorder %s43, %s46
    %p55 = scmp.eq.s32.totalorder %s19, 3
    %p56 = por %p54, %p55
    %p57 = scmp.ne.s32.totalorder %s46, %s47
    %p58 = scmp.eq.s32.totalorder %s19, 0
    %p59 = por %p57, %p58
    %p60 = scmp.ne.s32.totalorder %s46, %s47
    %p61 = scmp.eq.s32.totalorder %s20, 3
    %p62 = por %p60, %p61
    %p64 = scmp.ne.s32.totalorder %s47, %s63
    %p65 = scmp.eq.s32.totalorder %s20, 0
    %p66 = por %p64, %p65
    %s68 = sadd.s32 %s67, 1
    %p71 = scmp.eq.s32.totalorder %s14, 3
    %p72 = scmp.ne.s32.totalorder %s67, %s69
    %p73 = scmp.eq.s32.totalorder %s14, 0
    %p74 = por %p72, %p73
    %p75 = scmp.ne.s32.totalorder %s67, %s69
    %p76 = scmp.eq.s32.totalorder %s19, 3
    %p77 = por %p75, %p76
    %p78 = scmp.ne.s32.totalorder %s69, %s70
    %p79 = scmp.eq.s32.totalorder %s19, 0
    %p80 = por %p78, %p79
    %p81 = scmp.ne.s32.totalorder %s69, %s70
    %p82 = scmp.eq.s32.totalorder %s20, 3
    %p83 = por %p81, %p82
    %p85 = scmp.ne.s32.totalorder %s70, %s84
    %p86 = scmp.eq.s32.totalorder %s20, 0
    %p87 = por %p85, %p86
    %s89 = sadd.s32 %s88, 1
    %p92 = scmp.eq.s32.totalorder %s14, 3
    %p93 = scmp.ne.s32.totalorder %s88, %s90
    %p94 = scmp.eq.s32.totalorder %s14, 0
    %p95 = por %p93, %p94
    %p96 = scmp.ne.s32.totalorder %s88, %s90
    %p97 = scmp.eq.s32.totalorder %s19, 3
    %p98 = por %p96, %p97
    %p99 = scmp.ne.s32.totalorder %s90, %s91
    %p100 = scmp.eq.s32.totalorder %s19, 0
    %p101 = por %p99, %p100
    %p102 = scmp.ne.s32.totalorder %s90, %s91
    %p103 = scmp.eq.s32.totalorder %s20, 3
    %p104 = por %p102, %p103
    %p106 = scmp.ne.s32.totalorder %s91, %s105
    %p107 = scmp.eq.s32.totalorder %s20, 0
    %p108 = por %p106, %p107
    %s110 = sadd.s32 %s109, 1
    %p113 = scmp.eq.s32.totalorder %s14, 3
    %p114 = scmp.ne.s32.totalorder %s109, %s111
    %p115 = scmp.eq.s32.totalorder %s14, 0
    %p116 = por %p114, %p115
    %p117 = scmp.ne.s32.totalorder %s109, %s111
    %p118 = scmp.eq.s32.totalorder %s19, 3
    %p119 = por %p117, %p118
    %p120 = scmp.ne.s32.totalorder %s111, %s112
    %p121 = scmp.eq.s32.totalorder %s19, 0
    %p122 = por %p120, %p121
    %p123 = scmp.ne.s32.totalorder %s111, %s112
    %p124 = scmp.eq.s32.totalorder %s20, 3
    %p125 = por %p123, %p124
    %p127 = scmp.ne.s32.totalorder %s112, %s126
    %p128 = scmp.eq.s32.totalorder %s20, 0
    %p129 = por %p127, %p128
    %s131 = sadd.s32 %s130, 1
    %p134 = scmp.eq.s32.totalorder %s14, 3
    %p135 = scmp.ne.s32.totalorder %s130, %s132
    %p136 = scmp.eq.s32.totalorder %s14, 0
    %p137 = por %p135, %p136
    %p138 = scmp.ne.s32.totalorder %s130, %s132
    %p139 = scmp.eq.s32.totalorder %s19, 3
    %p140 = por %p138, %p139
    %p141 = scmp.ne.s32.totalorder %s132, %s133
    %p142 = scmp.eq.s32.totalorder %s19, 0
    %p143 = por %p141, %p142
    %p144 = scmp.ne.s32.totalorder %s132, %s133
    %p145 = scmp.eq.s32.totalorder %s20, 3
    %p146 = por %p144, %p145
    %p148 = scmp.ne.s32.totalorder %s133, %s147
    %p149 = scmp.eq.s32.totalorder %s20, 0
    %p150 = por %p148, %p149
    %s152 = sadd.s32 %s151, 1
    %p155 = scmp.eq.s32.totalorder %s14, 3
    %p156 = scmp.ne.s32.totalorder %s151, %s153
    %p157 = scmp.eq.s32.totalorder %s14, 0
    %p158 = por %p156, %p157
    %p159 = scmp.ne.s32.totalorder %s151, %s153
    %p160 = scmp.eq.s32.totalorder %s19, 3
    %p161 = por %p159, %p160
    %p162 = scmp.ne.s32.totalorder %s153, %s154
    %p163 = scmp.eq.s32.totalorder %s19, 0
    %p164 = por %p162, %p163
    %p165 = scmp.ne.s32.totalorder %s153, %s154
    %p166 = scmp.eq.s32.totalorder %s20, 3
    %p167 = por %p165, %p166
    %p169 = scmp.ne.s32.totalorder %s154, %s168
    %p170 = scmp.eq.s32.totalorder %s20, 0
    %p171 = por %p169, %p170
    %s173 = sadd.s32 %s172, 1
    %p176 = scmp.eq.s32.totalorder %s14, 3
    %p177 = scmp.ne.s32.totalorder %s172, %s174
    %p178 = scmp.eq.s32.totalorder %s14, 0
    %p179 = por %p177, %p178
    %p180 = scmp.ne.s32.totalorder %s172, %s174
    %p181 = scmp.eq.s32.totalorder %s19, 3
    %p182 = por %p180, %p181
    %p183 = scmp.ne.s32.totalorder %s174, %s175
    %p184 = scmp.eq.s32.totalorder %s19, 0
    %p185 = por %p183, %p184
    %p186 = scmp.ne.s32.totalorder %s174, %s175
    %p187 = scmp.eq.s32.totalorder %s20, 3
    %p188 = por %p186, %p187
    %p190 = scmp.ne.s32.totalorder %s175, %s189
    %p191 = scmp.eq.s32.totalorder %s20, 0
    %p192 = por %p190, %p191
    %s194 = sadd.s32 %s193, 1
    %p197 = scmp.eq.s32.totalorder %s14, 3
    %p198 = scmp.ne.s32.totalorder %s193, %s195
    %p199 = scmp.eq.s32.totalorder %s14, 0
    %p200 = por %p198, %p199
    %p201 = scmp.ne.s32.totalorder %s193, %s195
    %p202 = scmp.eq.s32.totalorder %s19, 3
    %p203 = por %p201, %p202
    %p204 = scmp.ne.s32.totalorder %s195, %s196
    %p205 = scmp.eq.s32.totalorder %s19, 0
    %p206 = por %p204, %p205
    %p207 = scmp.ne.s32.totalorder %s195, %s196
    %p208 = scmp.eq.s32.totalorder %s20, 3
    %p209 = por %p207, %p208
    %p211 = scmp.ne.s32.totalorder %s196, %s210
    %p212 = scmp.eq.s32.totalorder %s20, 0
    %p213 = por %p211, %p212
    %s214 = smul.u32 %s22, %s23
    %s215 = smul.u32 %s36, %s32
    %s216 = ssub.s32 %s21, %s40
    %s217 = ssub.s32 %s214, %s215
    %s218 = sor.u32 %s216, %s217
    %p219 = scmp.eq.s32.totalorder %s218, 0
    %s221 = sadd.s32 %s220, 1
    %s222 = scalar_select %p219, %s220, %s221
    %p225 = pneg %p219
    %p226 = scmp.eq.s32.totalorder %s14, 3
    %p227 = por %p225, %p226
    %p228 = scmp.ne.s32.totalorder %s220, %s223
    %p229 = scmp.eq.s32.totalorder %s14, 0
    %p230 = por %p228, %p229
    %p231 = scmp.ne.s32.totalorder %s220, %s223
    %p232 = scmp.eq.s32.totalorder %s19, 3
    %p233 = por %p231, %p232
    %p234 = scmp.ne.s32.totalorder %s223, %s224
    %p235 = scmp.eq.s32.totalorder %s19, 0
    %p236 = por %p234, %p235
    %p237 = scmp.ne.s32.totalorder %s223, %s224
    %p238 = scmp.eq.s32.totalorder %s20, 3
    %p239 = por %p237, %p238
    %p241 = scmp.ne.s32.totalorder %s224, %s240
    %p242 = scmp.eq.s32.totalorder %s20, 0
    %p243 = por %p241, %p242
    %p244 = scmp.le.s32.totalorder 1, %s14
    %p245 = scmp.lt.s32.totalorder %s14, 5
    %p246 = pnand %p244, %p245
    %p247 = pneg %p246
    // Predicated region
    $region9: #{down_block.1} parent=5 // pred_check
      _
    $region10: #{down_block.1} parent=5 // pred_check_branch
      %249 = sbr.rel (%p246) target = $region12
    $region11: #{down_block.1} parent=5 // pred_region
      %s250 = ssub.s32 %s14, 1
      // Predicated region
      $region13: #{down_block.1} parent=11 // pred_check
        %p251 = pneg %p80
      $region14: #{down_block.1} parent=11 // pred_check_branch
        %253 = sbr.rel (%p251) target = $region16
      $region15: #{down_block.1} parent=11 // pred_region
        _
      $region16: #{down_block.1} parent=11 // pred_fallthru
        _
      // Predicated region
      $region17: #{down_block.1} parent=11 // pred_check
        %p254 = pneg %p101
      $region18: #{down_block.1} parent=11 // pred_check_branch
        %256 = sbr.rel (%p254) target = $region20
      $region19: #{down_block.1} parent=11 // pred_region
        _
      $region20: #{down_block.1} parent=11 // pred_fallthru
        _
      // Predicated region
      $region21: #{down_block.1} parent=11 // pred_check
        %p257 = pneg %p122
      $region22: #{down_block.1} parent=11 // pred_check_branch
        %259 = sbr.rel (%p257) target = $region24
      $region23: #{down_block.1} parent=11 // pred_region
        _
      $region24: #{down_block.1} parent=11 // pred_fallthru
        _
      // Predicated region
      $region25: #{down_block.1} parent=11 // pred_check
        %p260 = pneg %p143
      $region26: #{down_block.1} parent=11 // pred_check_branch
        %262 = sbr.rel (%p260) target = $region28
      $region27: #{down_block.1} parent=11 // pred_region
        _
      $region28: #{down_block.1} parent=11 // pred_fallthru
        _
      // Predicated region
      $region29: #{down_block.1} parent=11 // pred_check
        %p263 = pneg %p164
      $region30: #{down_block.1} parent=11 // pred_check_branch
        %265 = sbr.rel (%p263) target = $region32
      $region31: #{down_block.1} parent=11 // pred_region
        _
      $region32: #{down_block.1} parent=11 // pred_fallthru
        _
      // Predicated region
      $region33: #{down_block.1} parent=11 // pred_check
        %p266 = pneg %p185
      $region34: #{down_block.1} parent=11 // pred_check_branch
        %268 = sbr.rel (%p266) target = $region36
      $region35: #{down_block.1} parent=11 // pred_region
        _
      $region36: #{down_block.1} parent=11 // pred_fallthru
        _
      // Predicated region
      $region37: #{down_block.1} parent=11 // pred_check
        %p269 = pneg %p206
      $region38: #{down_block.1} parent=11 // pred_check_branch
        %271 = sbr.rel (%p269) target = $region40
      $region39: #{down_block.1} parent=11 // pred_region
        _
      $region40: #{down_block.1} parent=11 // pred_fallthru
        _
    $region12: #{down_block.1} parent=5 // pred_fallthru
      _
    %p272 = scmp.lt.s32.totalorder %s14, 4
    // Predicated region
    $region41: #{down_block.1} parent=5 // pred_check
      %p273 = pneg %p272
    $region42: #{down_block.1} parent=5 // pred_check_branch
      %275 = sbr.rel (%p273) target = $region44
    $region43: #{down_block.1} parent=5 // pred_region
      // Predicated region
      $region45: #{down_block.1} parent=43 // pred_check
        %p276 = pneg %p53
      $region46: #{down_block.1} parent=43 // pred_check_branch
        %278 = sbr.rel (%p276) target = $region48
      $region47: #{down_block.1} parent=43 // pred_region
        %p279 = scmp.lt.s32.totalorder %s21, 1
        %s280 = scalar_select %p279, %s21, 1
        %s281 = smul.addr %s280, 72
        %s282 = smul.addr %s281, 8
        %s283 = scalar_lea.vmem %s0, %s282
      $region48: #{down_block.1} parent=43 // pred_fallthru
        _
    $region44: #{down_block.1} parent=5 // pred_fallthru
      _
    %p284 = scmp.le.s32.totalorder 1, %s14
    %p285 = scmp.lt.s32.totalorder %s14, 5
    %p286 = pnand %p284, %p285
    %p287 = pneg %p286
    // Predicated region
    $region49: #{down_block.1} parent=5 // pred_check
      _
    $region50: #{down_block.1} parent=5 // pred_check_branch
      %289 = sbr.rel (%p286) target = $region52
    $region51: #{down_block.1} parent=5 // pred_region
      %s290 = ssub.s32 %s14, 1
      %p291 = scmp.lt.s32.totalorder %s24, 1
      %s292 = scalar_select %p291, %s24, 1
      %s293 = smul.addr %s292, 72
      %s294 = smul.addr %s293, 8
      %s295 = scalar_lea.vmem %s0, %s294
      %p296 = pneg %p59
      %p297 = pneg %p56
      %p298 = pneg %p80
      %p299 = pneg %p77
      %p300 = pneg %p101
      %p301 = pneg %p98
      %p302 = pneg %p122
      %p303 = pneg %p119
      %p304 = pneg %p143
      %p305 = pneg %p140
      %p306 = pneg %p164
      %p307 = pneg %p161
      %p308 = pneg %p185
      %p309 = pneg %p182
      %p310 = pneg %p206
      %p311 = pneg %p203
      %p312 = pneg %p236
      %p313 = pneg %p233
      %s314 = smul.u32 %s25, %s26
      %s315 = smul.u32 8, %s314
      %p316 = scmp.lt.s32.totalorder %s24, 1
      %s317 = scalar_select %p316, %s24, 1
      %p318 = scmp.lt.s32.totalorder %s315, 7
      %s319 = scalar_select %p318, %s315, 7
      %s320 = smul.addr %s317, 8
      %s321 = sadd.s32 %s319, %s320
      %s322 = smul.addr %s321, 8
      %s323 = scalar_lea.vmem %s8, %s322
      %p324 = scmp.lt.s32.totalorder %s24, 1
      %s325 = scalar_select %p324, %s24, 1
      %s326 = smul.addr %s325, 72
      %s327 = smul.addr %s326, 8
      %s328 = scalar_lea.vmem %s0, %s327
      %s329 = smul.u32 %s25, %s26
      %s330 = smul.u32 8, %s329
      %p331 = scmp.lt.s32.totalorder %s24, 1
      %s332 = scalar_select %p331, %s24, 1
      %p333 = scmp.lt.s32.totalorder %s330, 7
      %s334 = scalar_select %p333, %s330, 7
      %s335 = smul.addr %s332, 8
      %s336 = sadd.s32 %s334, %s335
      %s337 = smul.addr %s336, 8
      %s338 = scalar_lea.vmem %s8, %s337
      %s339 = smul.u32 %s25, %s26
      %s340 = smul.u32 8, %s339
      %s341 = smul.u32 %s26, 64
      %p342 = scmp.eq.s32.totalorder %s25, 0
      %p343 = scmp.eq.s32.totalorder %s26, 0
      %p344 = pnand %p342, %p343
      %p345 = pneg %p344
      // Predicated region
      $region53: #{down_block.1} parent=51 // pred_check
        _
      $region54: #{down_block.1} parent=51 // pred_check_branch
        %347 = sbr.rel (%p344) target = $region56
      $region55: #{down_block.1} parent=51 // pred_region
        %vm348 = vcmask 58368
        %349 = vst.msk [vmem:[#allocation3] sm:$0x3] %vm348, 0.0
      $region56: #{down_block.1} parent=51 // pred_fallthru
        _
      // Predicated region
      $region57: #{down_block.1} parent=51 // pred_check
        %p350 = pneg %p342
      $region58: #{down_block.1} parent=51 // pred_check_branch
        %352 = sbr.rel (%p350) target = $region60
      $region59: #{down_block.1} parent=51 // pred_region
        %s353 = smul.u32 %s26, 8
        %s354 = smul.u32 %s353, 16
        %s355 = scalar_lea.vmem %s328, %s354
        %v356 = vld [vmem:[%s355] sm:$0xff]
        %v357 = vld [vmem:[%s355 + $0x10] sm:$0xff]
        %v358 = vld [vmem:[%s355 + $0x20] sm:$0xff]
        %v359 = vld [vmem:[%s355 + $0x30] sm:$0xff]
        %v360 = vld [vmem:[%s355 + $0x40] sm:$0xff]
        %v361 = vld [vmem:[%s355 + $0x50] sm:$0xff]
        %v362 = vld [vmem:[%s355 + $0x60] sm:$0xff]
        %v363 = vld [vmem:[%s355 + $0x70] sm:$0xff]
        %s364 = sadd.s32 %s354, 144
        %s365 = scalar_lea.vmem %s328, %s364
        %v366 = vld [vmem:[%s365] sm:$0xff]
        %v367 = vld [vmem:[%s365 + $0x10] sm:$0xff]
        %v368 = vld [vmem:[%s365 + $0x20] sm:$0xff]
        %v369 = vld [vmem:[%s365 + $0x30] sm:$0xff]
        %v370 = vld [vmem:[%s365 + $0x40] sm:$0xff]
        %v371 = vld [vmem:[%s365 + $0x50] sm:$0xff]
        %v372 = vld [vmem:[%s365 + $0x60] sm:$0xff]
        %v373 = vld [vmem:[%s365 + $0x70] sm:$0xff]
        %v374 = vld [vmem:[%s355 + $0x1] sm:$0xff]
        %v375 = vld [vmem:[%s355 + $0x11] sm:$0xff]
        %v376 = vld [vmem:[%s355 + $0x21] sm:$0xff]
        %v377 = vld [vmem:[%s355 + $0x31] sm:$0xff]
        %v378 = vld [vmem:[%s355 + $0x41] sm:$0xff]
        %v379 = vld [vmem:[%s355 + $0x51] sm:$0xff]
        %v380 = vld [vmem:[%s355 + $0x61] sm:$0xff]
        %v381 = vld [vmem:[%s355 + $0x71] sm:$0xff]
        %s382 = sadd.s32 %s354, 288
        %s383 = scalar_lea.vmem %s328, %s382
        %v384 = vld [vmem:[%s383] sm:$0xff]
        %v385 = vld [vmem:[%s383 + $0x10] sm:$0xff]
        %v386 = vld [vmem:[%s383 + $0x20] sm:$0xff]
        %v387 = vld [vmem:[%s383 + $0x30] sm:$0xff]
        %v388 = vld [vmem:[%s383 + $0x40] sm:$0xff]
        %v389 = vld [vmem:[%s383 + $0x50] sm:$0xff]
        %v390 = vld [vmem:[%s383 + $0x60] sm:$0xff]
        %v391 = vld [vmem:[%s383 + $0x70] sm:$0xff]
        %s392 = sadd.s32 %s364, 288
        %s393 = scalar_lea.vmem %s328, %s392
        %v394 = vld [vmem:[%s393] sm:$0xff]
        %v395 = vld [vmem:[%s393 + $0x10] sm:$0xff]
        %v396 = vld [vmem:[%s393 + $0x20] sm:$0xff]
        %v397 = vld [vmem:[%s393 + $0x30] sm:$0xff]
        %v398 = vld [vmem:[%s393 + $0x40] sm:$0xff]
        %v399 = vld [vmem:[%s393 + $0x50] sm:$0xff]
        %v400 = vld [vmem:[%s393 + $0x60] sm:$0xff]
        %v401 = vld [vmem:[%s393 + $0x70] sm:$0xff]
        %v402 = vld [vmem:[%s383 + $0x1] sm:$0xff]
        %v403 = vld [vmem:[%s383 + $0x11] sm:$0xff]
        %v404 = vld [vmem:[%s383 + $0x21] sm:$0xff]
        %v405 = vld [vmem:[%s383 + $0x31] sm:$0xff]
        %v406 = vld [vmem:[%s383 + $0x41] sm:$0xff]
        %v407 = vld [vmem:[%s383 + $0x51] sm:$0xff]
        %v408 = vld [vmem:[%s383 + $0x61] sm:$0xff]
        %v409 = vld [vmem:[%s383 + $0x71] sm:$0xff]
        %s410 = sadd.s32 %s353, 1
        %s411 = smul.u32 %s410, 16
        %s412 = scalar_lea.vmem %s328, %s411
        %v413 = vld [vmem:[%s412] sm:$0xff]
        %v414 = vld [vmem:[%s412 + $0x10] sm:$0xff]
        %v415 = vld [vmem:[%s412 + $0x20] sm:$0xff]
        %v416 = vld [vmem:[%s412 + $0x30] sm:$0xff]
        %v417 = vld [vmem:[%s412 + $0x40] sm:$0xff]
        %v418 = vld [vmem:[%s412 + $0x50] sm:$0xff]
        %v419 = vld [vmem:[%s412 + $0x60] sm:$0xff]
        %v420 = vld [vmem:[%s412 + $0x70] sm:$0xff]
        %s421 = sadd.s32 %s411, 144
        %s422 = scalar_lea.vmem %s328, %s421
        %v423 = vld [vmem:[%s422] sm:$0xff]
        %v424 = vld [vmem:[%s422 + $0x10] sm:$0xff]
        %v425 = vld [vmem:[%s422 + $0x20] sm:$0xff]
        %v426 = vld [vmem:[%s422 + $0x30] sm:$0xff]
        %v427 = vld [vmem:[%s422 + $0x40] sm:$0xff]
        %v428 = vld [vmem:[%s422 + $0x50] sm:$0xff]
        %v429 = vld [vmem:[%s422 + $0x60] sm:$0xff]
        %v430 = vld [vmem:[%s422 + $0x70] sm:$0xff]
        %v431 = vld [vmem:[%s412 + $0x1] sm:$0xff]
        %v432 = vld [vmem:[%s412 + $0x11] sm:$0xff]
        %v433 = vld [vmem:[%s412 + $0x21] sm:$0xff]
        %v434 = vld [vmem:[%s412 + $0x31] sm:$0xff]
        %v435 = vld [vmem:[%s412 + $0x41] sm:$0xff]
        %v436 = vld [vmem:[%s412 + $0x51] sm:$0xff]
        %v437 = vld [vmem:[%s412 + $0x61] sm:$0xff]
        %v438 = vld [vmem:[%s412 + $0x71] sm:$0xff]
        %447 = vrot.lane.b32.xlu0 %v366, 4
        %v448 = vpop.permute.xlu0 %447
        %449 = vrot.lane.b32.xlu0 %v367, 4
        %v450 = vpop.permute.xlu0 %449
        %451 = vrot.lane.b32.xlu0 %v368, 4
        %v452 = vpop.permute.xlu0 %451
        %453 = vrot.lane.b32.xlu0 %v369, 4
        %v454 = vpop.permute.xlu0 %453
        %455 = vrot.lane.b32.xlu0 %v370, 4
        %v456 = vpop.permute.xlu0 %455
        %457 = vrot.lane.b32.xlu0 %v371, 4
        %v458 = vpop.permute.xlu0 %457
        %459 = vrot.lane.b32.xlu0 %v372, 4
        %v460 = vpop.permute.xlu0 %459
        %461 = vrot.lane.b32.xlu0 %v373, 4
        %v462 = vpop.permute.xlu0 %461
        %479 = vrot.lane.b32.xlu0 %v374, 8
        %v480 = vpop.permute.xlu0 %479
        %481 = vrot.lane.b32.xlu0 %v375, 8
        %v482 = vpop.permute.xlu0 %481
        %483 = vrot.lane.b32.xlu0 %v376, 8
        %v484 = vpop.permute.xlu0 %483
        %485 = vrot.lane.b32.xlu0 %v377, 8
        %v486 = vpop.permute.xlu0 %485
        %487 = vrot.lane.b32.xlu0 %v378, 8
        %v488 = vpop.permute.xlu0 %487
        %489 = vrot.lane.b32.xlu0 %v379, 8
        %v490 = vpop.permute.xlu0 %489
        %491 = vrot.lane.b32.xlu0 %v380, 8
        %v492 = vpop.permute.xlu0 %491
        %493 = vrot.lane.b32.xlu0 %v381, 8
        %v494 = vpop.permute.xlu0 %493
        %511 = vrot.lane.b32.xlu0 %v384, 12
        %v512 = vpop.permute.xlu0 %511
        %513 = vrot.lane.b32.xlu0 %v385, 12
        %v514 = vpop.permute.xlu0 %513
        %515 = vrot.lane.b32.xlu0 %v386, 12
        %v516 = vpop.permute.xlu0 %515
        %517 = vrot.lane.b32.xlu0 %v387, 12
        %v518 = vpop.permute.xlu0 %517
        %519 = vrot.lane.b32.xlu0 %v388, 12
        %v520 = vpop.permute.xlu0 %519
        %521 = vrot.lane.b32.xlu0 %v389, 12
        %v522 = vpop.permute.xlu0 %521
        %523 = vrot.lane.b32.xlu0 %v390, 12
        %v524 = vpop.permute.xlu0 %523
        %525 = vrot.lane.b32.xlu0 %v391, 12
        %v526 = vpop.permute.xlu0 %525
        %543 = vrot.lane.b32.xlu0 %v394, 16
        %v544 = vpop.permute.xlu0 %543
        %545 = vrot.lane.b32.xlu0 %v395, 16
        %v546 = vpop.permute.xlu0 %545
        %547 = vrot.lane.b32.xlu0 %v396, 16
        %v548 = vpop.permute.xlu0 %547
        %549 = vrot.lane.b32.xlu0 %v397, 16
        %v550 = vpop.permute.xlu0 %549
        %551 = vrot.lane.b32.xlu0 %v398, 16
        %v552 = vpop.permute.xlu0 %551
        %553 = vrot.lane.b32.xlu0 %v399, 16
        %v554 = vpop.permute.xlu0 %553
        %555 = vrot.lane.b32.xlu0 %v400, 16
        %v556 = vpop.permute.xlu0 %555
        %557 = vrot.lane.b32.xlu0 %v401, 16
        %v558 = vpop.permute.xlu0 %557
        %575 = vrot.lane.b32.xlu0 %v402, 20
        %v576 = vpop.permute.xlu0 %575
        %577 = vrot.lane.b32.xlu0 %v403, 20
        %v578 = vpop.permute.xlu0 %577
        %579 = vrot.lane.b32.xlu0 %v404, 20
        %v580 = vpop.permute.xlu0 %579
        %581 = vrot.lane.b32.xlu0 %v405, 20
        %v582 = vpop.permute.xlu0 %581
        %583 = vrot.lane.b32.xlu0 %v406, 20
        %v584 = vpop.permute.xlu0 %583
        %585 = vrot.lane.b32.xlu0 %v407, 20
        %v586 = vpop.permute.xlu0 %585
        %587 = vrot.lane.b32.xlu0 %v408, 20
        %v588 = vpop.permute.xlu0 %587
        %589 = vrot.lane.b32.xlu0 %v409, 20
        %v590 = vpop.permute.xlu0 %589
        %607 = vrot.lane.b32.xlu0 %v413, 24
        %v608 = vpop.permute.xlu0 %607
        %609 = vrot.lane.b32.xlu0 %v414, 24
        %v610 = vpop.permute.xlu0 %609
        %611 = vrot.lane.b32.xlu0 %v415, 24
        %v612 = vpop.permute.xlu0 %611
        %613 = vrot.lane.b32.xlu0 %v416, 24
        %v614 = vpop.permute.xlu0 %613
        %615 = vrot.lane.b32.xlu0 %v417, 24
        %v616 = vpop.permute.xlu0 %615
        %617 = vrot.lane.b32.xlu0 %v418, 24
        %v618 = vpop.permute.xlu0 %617
        %619 = vrot.lane.b32.xlu0 %v419, 24
        %v620 = vpop.permute.xlu0 %619
        %621 = vrot.lane.b32.xlu0 %v420, 24
        %v622 = vpop.permute.xlu0 %621
        %639 = vrot.lane.b32.xlu0 %v423, 28
        %v640 = vpop.permute.xlu0 %639
        %641 = vrot.lane.b32.xlu0 %v424, 28
        %v642 = vpop.permute.xlu0 %641
        %643 = vrot.lane.b32.xlu0 %v425, 28
        %v644 = vpop.permute.xlu0 %643
        %645 = vrot.lane.b32.xlu0 %v426, 28
        %v646 = vpop.permute.xlu0 %645
        %647 = vrot.lane.b32.xlu0 %v427, 28
        %v648 = vpop.permute.xlu0 %647
        %649 = vrot.lane.b32.xlu0 %v428, 28
        %v650 = vpop.permute.xlu0 %649
        %651 = vrot.lane.b32.xlu0 %v429, 28
        %v652 = vpop.permute.xlu0 %651
        %653 = vrot.lane.b32.xlu0 %v430, 28
        %v654 = vpop.permute.xlu0 %653
        %671 = vrot.lane.b32.xlu0 %v431, 32
        %v672 = vpop.permute.xlu0 %671
        %673 = vrot.lane.b32.xlu0 %v432, 32
        %v674 = vpop.permute.xlu0 %673
        %675 = vrot.lane.b32.xlu0 %v433, 32
        %v676 = vpop.permute.xlu0 %675
        %677 = vrot.lane.b32.xlu0 %v434, 32
        %v678 = vpop.permute.xlu0 %677
        %679 = vrot.lane.b32.xlu0 %v435, 32
        %v680 = vpop.permute.xlu0 %679
        %681 = vrot.lane.b32.xlu0 %v436, 32
        %v682 = vpop.permute.xlu0 %681
        %683 = vrot.lane.b32.xlu0 %v437, 32
        %v684 = vpop.permute.xlu0 %683
        %685 = vrot.lane.b32.xlu0 %v438, 32
        %v686 = vpop.permute.xlu0 %685
        %vm695 = vcmask 31744
        %v696 = vsel %vm695, %v356, %v448
        %v697 = vsel %vm695, %v357, %v450
        %v698 = vsel %vm695, %v358, %v452
        %v699 = vsel %vm695, %v359, %v454
        %v700 = vsel %vm695, %v360, %v456
        %v701 = vsel %vm695, %v361, %v458
        %v702 = vsel %vm695, %v362, %v460
        %v703 = vsel %vm695, %v363, %v462
        %vm704 = vcmask 64512
        %v705 = vsel %vm704, %v696, %v480
        %v706 = vsel %vm704, %v697, %v482
        %v707 = vsel %vm704, %v698, %v484
        %v708 = vsel %vm704, %v699, %v486
        %v709 = vsel %vm704, %v700, %v488
        %v710 = vsel %vm704, %v701, %v490
        %v711 = vsel %vm704, %v702, %v492
        %v712 = vsel %vm704, %v703, %v494
        %vm713 = vcmask 97280
        %v714 = vsel %vm713, %v705, %v512
        %v715 = vsel %vm713, %v706, %v514
        %v716 = vsel %vm713, %v707, %v516
        %v717 = vsel %vm713, %v708, %v518
        %v718 = vsel %vm713, %v709, %v520
        %v719 = vsel %vm713, %v710, %v522
        %v720 = vsel %vm713, %v711, %v524
        %v721 = vsel %vm713, %v712, %v526
        %vm722 = vcmask 130048
        %v723 = vsel %vm722, %v714, %v544
        %v724 = vsel %vm722, %v715, %v546
        %v725 = vsel %vm722, %v716, %v548
        %v726 = vsel %vm722, %v717, %v550
        %v727 = vsel %vm722, %v718, %v552
        %v728 = vsel %vm722, %v719, %v554
        %v729 = vsel %vm722, %v720, %v556
        %v730 = vsel %vm722, %v721, %v558
        %vm731 = vcmask 162816
        %v732 = vsel %vm731, %v723, %v576
        %v733 = vsel %vm731, %v724, %v578
        %v734 = vsel %vm731, %v725, %v580
        %v735 = vsel %vm731, %v726, %v582
        %v736 = vsel %vm731, %v727, %v584
        %v737 = vsel %vm731, %v728, %v586
        %v738 = vsel %vm731, %v729, %v588
        %v739 = vsel %vm731, %v730, %v590
        %vm740 = vcmask 195584
        %v741 = vsel %vm740, %v732, %v608
        %v742 = vsel %vm740, %v733, %v610
        %v743 = vsel %vm740, %v734, %v612
        %v744 = vsel %vm740, %v735, %v614
        %v745 = vsel %vm740, %v736, %v616
        %v746 = vsel %vm740, %v737, %v618
        %v747 = vsel %vm740, %v738, %v620
        %v748 = vsel %vm740, %v739, %v622
        %vm749 = vcmask 228352
        %v750 = vsel %vm749, %v741, %v640
        %v751 = vsel %vm749, %v742, %v642
        %v752 = vsel %vm749, %v743, %v644
        %v753 = vsel %vm749, %v744, %v646
        %v754 = vsel %vm749, %v745, %v648
        %v755 = vsel %vm749, %v746, %v650
        %v756 = vsel %vm749, %v747, %v652
        %v757 = vsel %vm749, %v748, %v654
        %vm758 = vcmask 261120
        %v759 = vsel %vm758, %v750, %v672
        %v760 = vsel %vm758, %v751, %v674
        %v761 = vsel %vm758, %v752, %v676
        %v762 = vsel %vm758, %v753, %v678
        %v763 = vsel %vm758, %v754, %v680
        %v764 = vsel %vm758, %v755, %v682
        %v765 = vsel %vm758, %v756, %v684
        %v766 = vsel %vm758, %v757, %v686
        %v767 = vld [vmem:[%s1] sm:$0xff]
        %v768 = vld [vmem:[%s1 + $0x8] sm:$0xff]
        %v769 = vld [vmem:[%s1 + $0x10] sm:$0xff]
        %v770 = vld [vmem:[%s1 + $0x18] sm:$0xff]
        %v771 = vld [vmem:[%s1 + $0x20] sm:$0xf]
        %vm772 = vcmask 293888
        %v774 = vsel %vm772, %v759, 0
        %v777 = vsel %vm772, %v760, 0
        %v780 = vsel %vm772, %v761, 0
        %v783 = vsel %vm772, %v762, 0
        %v786 = vsel %vm772, %v763, 0
        %v789 = vsel %vm772, %v764, 0
        %v792 = vsel %vm772, %v765, 0
        %v795 = vsel %vm772, %v766, 0
        %vm797 = vcmask 1043456
        %v799 = vsel %vm797, %v771, 0
        %801 = vmatprep.subr.mxu0 0.0
        %802 = vmatpush1.msra.mxu0 %v767
        %803 = vmatprep.subr.mxu0 0.0
        %804 = vmatpush1.msra.mxu0 %v768
        %805 = vmatprep.subr.mxu0 0.0
        %806 = vmatpush1.msra.mxu0 %v769
        %807 = vmatprep.subr.mxu0 0.0
        %808 = vmatpush1.msra.mxu0 %v770
        %809 = vmatprep.subr.mxu0 0.0
        %810 = vmatpush1.msra.mxu0 %v799
        %811 = vmatprep.subr.mxu0 0.0
        %812 = vmatpush1.msra.mxu0 0.0
        %813 = vmatprep.subr.mxu0 0.0
        %814 = vmatpush1.msra.mxu0 0.0
        %815 = vmatprep.subr.mxu0 0.0
        %816 = vmatpush1.msra.mxu0 0.0
        %817 = vmatprep.subr.mxu0 0.0
        %818 = vmatpush1.msra.mxu0 0.0
        %819 = vmatprep.subr.mxu0 0.0
        %820 = vmatpush1.msra.mxu0 0.0
        %821 = vmatprep.subr.mxu0 0.0
        %822 = vmatpush1.msra.mxu0 0.0
        %823 = vmatprep.subr.mxu0 0.0
        %824 = vmatpush1.msra.mxu0 0.0
        %825 = vmatprep.subr.mxu0 0.0
        %826 = vmatpush1.msra.mxu0 0.0
        %827 = vmatprep.subr.mxu0 0.0
        %828 = vmatpush1.msra.mxu0 0.0
        %829 = vmatprep.subr.mxu0 0.0
        %830 = vmatpush1.msra.mxu0 0.0
        %831 = vmatprep.subr.mxu0 0.0
        %832 = vmatpush1.msra.mxu0 0.0
        %833 = vmatprep.subr.mxu0 0.0
        %834 = vmatpush1.msra.mxu0 0.0
        %835 = vmatprep.subr.mxu0 0.0
        %836 = vmatpush1.msra.mxu0 0.0
        %837 = vmatprep.subr.mxu0 0.0
        %838 = vmatpush1.msra.mxu0 0.0
        %839 = vmatprep.subr.mxu0 0.0
        %840 = vmatpush1.msra.mxu0 0.0
        %841 = vmatprep.subr.mxu0 0.0
        %842 = vmatpush1.msra.mxu0 0.0
        %843 = vmatprep.subr.mxu0 0.0
        %844 = vmatpush1.msra.mxu0 0.0
        %845 = vmatprep.subr.mxu0 0.0
        %846 = vmatpush1.msra.mxu0 0.0
        %847 = vmatprep.subr.mxu0 0.0
        %848 = vmatpush1.msra.mxu0 0.0
        %849 = vmatprep.subr.mxu0 0.0
        %850 = vmatpush1.msra.mxu0 0.0
        %851 = vmatprep.subr.mxu0 0.0
        %852 = vmatpush1.msra.mxu0 0.0
        %853 = vmatprep.subr.mxu0 0.0
        %854 = vmatpush1.msra.mxu0 0.0
        %855 = vmatprep.subr.mxu0 0.0
        %856 = vmatpush1.msra.mxu0 0.0
        %857 = vmatprep.subr.mxu0 0.0
        %858 = vmatpush1.msra.mxu0 0.0
        %859 = vmatprep.subr.mxu0 0.0
        %860 = vmatpush1.msra.mxu0 0.0
        %861 = vmatprep.subr.mxu0 0.0
        %862 = vmatpush1.msra.mxu0 0.0
        %863 = vmatprep.subr.mxu0 0.0
        %864 = vmatpush1.msra.mxu0 0.0
        %865 = vmatprep.mubr.f32.mxu0 0.0
        %866 = vmatmul.mubr.f32.gmra.mrb[0].mxu0 %v774
        %v867 = vpop.f32.mrb[0].mxu0
        %v868 = vadd.f32 0.0, %v867
        %v869 = vpop.f32.mrb[0].mxu0
        %870 = vmatprep.mubr.f32.mxu0 0.0
        %871 = vmatmul.mubr.f32.gmra.mrb[0].mxu0 %v777
        %v872 = vpop.f32.mrb[0].mxu0
        %v873 = vadd.f32 0.0, %v872
        %v874 = vpop.f32.mrb[0].mxu0
        %875 = vmatprep.mubr.f32.mxu0 0.0
        %876 = vmatmul.mubr.f32.gmra.mrb[0].mxu0 %v780
        %v877 = vpop.f32.mrb[0].mxu0
        %v878 = vadd.f32 0.0, %v877
        %v879 = vpop.f32.mrb[0].mxu0
        %880 = vmatprep.mubr.f32.mxu0 0.0
        %881 = vmatmul.mubr.f32.gmra.mrb[0].mxu0 %v783
        %v882 = vpop.f32.mrb[0].mxu0
        %v883 = vadd.f32 0.0, %v882
        %v884 = vpop.f32.mrb[0].mxu0
        %885 = vmatprep.mubr.f32.mxu0 0.0
        %886 = vmatmul.mubr.f32.gmra.mrb[0].mxu0 %v786
        %v887 = vpop.f32.mrb[0].mxu0
        %v888 = vadd.f32 0.0, %v887
        %v889 = vpop.f32.mrb[0].mxu0
        %890 = vmatprep.mubr.f32.mxu0 0.0
        %891 = vmatmul.mubr.f32.gmra.mrb[0].mxu0 %v789
        %v892 = vpop.f32.mrb[0].mxu0
        %v893 = vadd.f32 0.0, %v892
        %v894 = vpop.f32.mrb[0].mxu0
        %895 = vmatprep.mubr.f32.mxu0 0.0
        %896 = vmatmul.mubr.f32.gmra.mrb[0].mxu0 %v792
        %v897 = vpop.f32.mrb[0].mxu0
        %v898 = vadd.f32 0.0, %v897
        %v899 = vpop.f32.mrb[0].mxu0
        %900 = vmatprep.mubr.f32.mxu0 0.0
        %901 = vmatmul.mubr.f32.gmra.mrb[0].mxu0 %v795
        %v902 = vpop.f32.mrb[0].mxu0
        %v903 = vadd.f32 0.0, %v902
        %v904 = vpop.f32.mrb[0].mxu0
        %905 = vdwg.mxu0
        %s906 = scalar_lea.vmem [#allocation2], %s341
        %907 = vst.msk [vmem:[%s906] sm:$0xff] %vm704, %v868
        %908 = vst.msk [vmem:[%s906 + $0x8] sm:$0xff] %vm704, %v873
        %909 = vst.msk [vmem:[%s906 + $0x10] sm:$0xff] %vm704, %v878
        %910 = vst.msk [vmem:[%s906 + $0x18] sm:$0xff] %vm704, %v883
        %911 = vst.msk [vmem:[%s906 + $0x20] sm:$0xff] %vm704, %v888
        %912 = vst.msk [vmem:[%s906 + $0x28] sm:$0xff] %vm704, %v893
        %913 = vst.msk [vmem:[%s906 + $0x30] sm:$0xff] %vm704, %v898
        %914 = vst.msk [vmem:[%s906 + $0x38] sm:$0xff] %vm704, %v903
        %v915 = vld [vmem:[#allocation3] sm:$0x3]
        %v916 = vsel %vm704, %v868, 0.0
        %v917 = vsel %vm704, %v873, 0.0
        %v918 = vadd.f32 %v916, %v917
        %v919 = vsel %vm704, %v878, 0.0
        %v920 = vadd.f32 %v918, %v919
        %v921 = vsel %vm704, %v883, 0.0
        %v922 = vadd.f32 %v920, %v921
        %v923 = vsel %vm704, %v888, 0.0
        %v924 = vadd.f32 %v922, %v923
        %v925 = vsel %vm704, %v893, 0.0
        %v926 = vadd.f32 %v924, %v925
        %v927 = vsel %vm704, %v898, 0.0
        %v928 = vadd.f32 %v926, %v927
        %v929 = vsel %vm704, %v903, 0.0
        %v930 = vadd.f32 %v928, %v929
        %v931 = vrot.slane %v930, 4
        %v932 = vadd.f32 %v930, %v931
        %v933 = vrot.slane %v932, 2
        %v934 = vadd.f32 %v932, %v933
        %v935 = vrot.slane %v934, 1
        %v936 = vadd.f32 %v934, %v935
        %v937 = vmul.f32 %v868, %v868
        %v938 = vmul.f32 %v873, %v873
        %v939 = vmul.f32 %v878, %v878
        %v940 = vmul.f32 %v883, %v883
        %v941 = vmul.f32 %v888, %v888
        %v942 = vmul.f32 %v893, %v893
        %v943 = vmul.f32 %v898, %v898
        %v944 = vmul.f32 %v903, %v903
        %v945 = vsel %vm704, %v937, 0.0
        %v946 = vsel %vm704, %v938, 0.0
        %v947 = vadd.f32 %v945, %v946
        %v948 = vsel %vm704, %v939, 0.0
        %v949 = vadd.f32 %v947, %v948
        %v950 = vsel %vm704, %v940, 0.0
        %v951 = vadd.f32 %v949, %v950
        %v952 = vsel %vm704, %v941, 0.0
        %v953 = vadd.f32 %v951, %v952
        %v954 = vsel %vm704, %v942, 0.0
        %v955 = vadd.f32 %v953, %v954
        %v956 = vsel %vm704, %v943, 0.0
        %v957 = vadd.f32 %v955, %v956
        %v958 = vsel %vm704, %v944, 0.0
        %v959 = vadd.f32 %v957, %v958
        %v960 = vrot.slane %v959, 4
        %v961 = vadd.f32 %v959, %v960
        %v962 = vrot.slane %v961, 2
        %v963 = vadd.f32 %v961, %v962
        %v964 = vrot.slane %v963, 1
        %v965 = vadd.f32 %v963, %v964
        %vm966 = vcmask 1040384
        %v967 = vsel %vm966, %v936, %v965
        %v968 = vadd.f32 %v915, %v967
        %vm969 = vcmask 58368
        %970 = vst.msk [vmem:[#allocation3] sm:$0x3] %vm969, %v968
      $region60: #{down_block.1} parent=51 // pred_fallthru
        _
      %p971 = scmp.eq.s32.totalorder %s25, 1
      // Predicated region
      $region61: #{down_block.1} parent=51 // pred_check
        %p972 = pneg %p971
      $region62: #{down_block.1} parent=51 // pred_check_branch
        %974 = sbr.rel (%p972) target = $region64
      $region63: #{down_block.1} parent=51 // pred_region
        %v975 = vld [vmem:[#allocation3] sm:$0x3]
        %vm976 = vcmask 57344
        %v977 = vsel %vm976, %v975, 0.0
        %978 = vadd.xlane.f32.xlu0 %v977
        %v979 = vpop.xlane.xlu0 %978
        %v980 = vrot.slane %v979, 4
        %v981 = vadd.f32 %v979, %v980
        %v982 = vrot.slane %v981, 2
        %v983 = vadd.f32 %v981, %v982
        %v984 = vrot.slane %v983, 1
        %v985 = vadd.f32 %v983, %v984
        %s986 = vtos %v985
        %s987 = smul.f32 %s986, 0.001953125
        %v989 = vrot.slane %v975, 1
        %v991 = vsel %vm976, %v989, 0.0
        %992 = vadd.xlane.f32.xlu0 %v991
        %v993 = vpop.xlane.xlu0 %992
        %v994 = vrot.slane %v993, 4
        %v995 = vadd.f32 %v993, %v994
        %v996 = vrot.slane %v995, 2
        %v997 = vadd.f32 %v995, %v996
        %v998 = vrot.slane %v997, 1
        %v999 = vadd.f32 %v997, %v998
        %s1000 = vtos %v999
        %s1001 = smul.f32 %s1000, 0.001953125
        %s1002 = smul.f32 %s987, %s987
        %s1003 = ssub.f32 %s1001, %s1002
        %s1004 = sadd.f32 %s1003, 1e-05
        %v1005 = vstv %s1004
        %v1006 = vrsqrt.pop %v1005
        %s1007 = vtos %v1006
        %s1008 = scalar_lea.vmem [#allocation2], %s341
        %v1009 = vld [vmem:[%s1008] sm:$0xff]
        %v1010 = vld [vmem:[%s1008 + $0x8] sm:$0xff]
        %v1011 = vld [vmem:[%s1008 + $0x10] sm:$0xff]
        %v1012 = vld [vmem:[%s1008 + $0x18] sm:$0xff]
        %v1013 = vld [vmem:[%s1008 + $0x20] sm:$0xff]
        %v1014 = vld [vmem:[%s1008 + $0x28] sm:$0xff]
        %v1015 = vld [vmem:[%s1008 + $0x30] sm:$0xff]
        %v1016 = vld [vmem:[%s1008 + $0x38] sm:$0xff]
        %v1017 = vstv %s987
        %v1018 = vsub.f32 %v1009, %v1017
        %v1019 = vsub.f32 %v1010, %v1017
        %v1020 = vsub.f32 %v1011, %v1017
        %v1021 = vsub.f32 %v1012, %v1017
        %v1022 = vsub.f32 %v1013, %v1017
        %v1023 = vsub.f32 %v1014, %v1017
        %v1024 = vsub.f32 %v1015, %v1017
        %v1025 = vsub.f32 %v1016, %v1017
        %v1026 = vstv %s1007
        %v1027 = vmul.f32 %v1018, %v1026
        %v1028 = vmul.f32 %v1019, %v1026
        %v1029 = vmul.f32 %v1020, %v1026
        %v1030 = vmul.f32 %v1021, %v1026
        %v1031 = vmul.f32 %v1022, %v1026
        %v1032 = vmul.f32 %v1023, %v1026
        %v1033 = vmul.f32 %v1024, %v1026
        %v1034 = vmul.f32 %v1025, %v1026
        %v1035 = vld [vmem:[%s2] sm:$0x1]
        %v1037 = vlaneseq
        %v1038 = vshrl.u32 %v1037, 7
        %v1039 = vsub.s32 0, %v1038
        %v1040 = vrot.slane %v1035, %v1039
        %v1042 = vmul.f32 %v1027, %v1040
        %v1043 = vmul.f32 %v1028, %v1040
        %v1044 = vmul.f32 %v1029, %v1040
        %v1045 = vmul.f32 %v1030, %v1040
        %v1046 = vmul.f32 %v1031, %v1040
        %v1047 = vmul.f32 %v1032, %v1040
        %v1048 = vmul.f32 %v1033, %v1040
        %v1049 = vmul.f32 %v1034, %v1040
        %v1050 = vld [vmem:[%s3] sm:$0x1]
        %v1052 = vlaneseq
        %v1053 = vshrl.u32 %v1052, 7
        %v1054 = vsub.s32 0, %v1053
        %v1055 = vrot.slane %v1050, %v1054
        %v1057 = vadd.f32 %v1042, %v1055
        %v1058 = vadd.f32 %v1043, %v1055
        %v1059 = vadd.f32 %v1044, %v1055
        %v1060 = vadd.f32 %v1045, %v1055
        %v1061 = vadd.f32 %v1046, %v1055
        %v1062 = vadd.f32 %v1047, %v1055
        %v1063 = vadd.f32 %v1048, %v1055
        %v1064 = vadd.f32 %v1049, %v1055
        %v1065 = vld [vmem:[%s4] sm:$0xff]
        %v1066 = vld [vmem:[%s5] sm:$0x1]
        %v1068 = vlaneseq
        %v1069 = vshrl.u32 %v1068, 7
        %v1070 = vsub.s32 0, %v1069
        %v1071 = vrot.slane %v1066, %v1070
        %vm1073 = vcmask 64512
        %v1075 = vsel %vm1073, %v1057, 0
        %v1078 = vsel %vm1073, %v1058, 0
        %v1081 = vsel %vm1073, %v1059, 0
        %v1084 = vsel %vm1073, %v1060, 0
        %v1087 = vsel %vm1073, %v1061, 0
        %v1090 = vsel %vm1073, %v1062, 0
        %v1093 = vsel %vm1073, %v1063, 0
        %v1096 = vsel %vm1073, %v1064, 0
        %1098 = vmatprep.subr.mxu0 0.0
        %1099 = vmatpush1.msra.mxu0 %v1065
        %1100 = vmatprep.subr.mxu0 0.0
        %1101 = vmatpush1.msra.mxu0 0.0
        %1102 = vmatprep.subr.mxu0 0.0
        %1103 = vmatpush1.msra.mxu0 0.0
        %1104 = vmatprep.subr.mxu0 0.0
        %1105 = vmatpush1.msra.mxu0 0.0
        %1106 = vmatprep.subr.mxu0 0.0
        %1107 = vmatpush1.msra.mxu0 0.0
        %1108 = vmatprep.subr.mxu0 0.0
        %1109 = vmatpush1.msra.mxu0 0.0
        %1110 = vmatprep.subr.mxu0 0.0
        %1111 = vmatpush1.msra.mxu0 0.0
        %1112 = vmatprep.subr.mxu0 0.0
        %1113 = vmatpush1.msra.mxu0 0.0
        %1114 = vmatprep.subr.mxu0 0.0
        %1115 = vmatpush1.msra.mxu0 0.0
        %1116 = vmatprep.subr.mxu0 0.0
        %1117 = vmatpush1.msra.mxu0 0.0
        %1118 = vmatprep.subr.mxu0 0.0
        %1119 = vmatpush1.msra.mxu0 0.0
        %1120 = vmatprep.subr.mxu0 0.0
        %1121 = vmatpush1.msra.mxu0 0.0
        %1122 = vmatprep.subr.mxu0 0.0
        %1123 = vmatpush1.msra.mxu0 0.0
        %1124 = vmatprep.subr.mxu0 0.0
        %1125 = vmatpush1.msra.mxu0 0.0
        %1126 = vmatprep.subr.mxu0 0.0
        %1127 = vmatpush1.msra.mxu0 0.0
        %1128 = vmatprep.subr.mxu0 0.0
        %1129 = vmatpush1.msra.mxu0 0.0
        %1130 = vmatprep.subr.mxu0 0.0
        %1131 = vmatpush1.msra.mxu0 0.0
        %1132 = vmatprep.subr.mxu0 0.0
        %1133 = vmatpush1.msra.mxu0 0.0
        %1134 = vmatprep.subr.mxu0 0.0
        %1135 = vmatpush1.msra.mxu0 0.0
        %1136 = vmatprep.subr.mxu0 0.0
        %1137 = vmatpush1.msra.mxu0 0.0
        %1138 = vmatprep.subr.mxu0 0.0
        %1139 = vmatpush1.msra.mxu0 0.0
        %1140 = vmatprep.subr.mxu0 0.0
        %1141 = vmatpush1.msra.mxu0 0.0
        %1142 = vmatprep.subr.mxu0 0.0
        %1143 = vmatpush1.msra.mxu0 0.0
        %1144 = vmatprep.subr.mxu0 0.0
        %1145 = vmatpush1.msra.mxu0 0.0
        %1146 = vmatprep.subr.mxu0 0.0
        %1147 = vmatpush1.msra.mxu0 0.0
        %1148 = vmatprep.subr.mxu0 0.0
        %1149 = vmatpush1.msra.mxu0 0.0
        %1150 = vmatprep.subr.mxu0 0.0
        %1151 = vmatpush1.msra.mxu0 0.0
        %1152 = vmatprep.subr.mxu0 0.0
        %1153 = vmatpush1.msra.mxu0 0.0
        %1154 = vmatprep.subr.mxu0 0.0
        %1155 = vmatpush1.msra.mxu0 0.0
        %1156 = vmatprep.subr.mxu0 0.0
        %1157 = vmatpush1.msra.mxu0 0.0
        %1158 = vmatprep.subr.mxu0 0.0
        %1159 = vmatpush1.msra.mxu0 0.0
        %1160 = vmatprep.subr.mxu0 0.0
        %1161 = vmatpush1.msra.mxu0 0.0
        %1162 = vmatprep.mubr.f32.mxu0 0.0
        %1163 = vmatmul.mubr.f32.gmra.mrb[0].mxu0 %v1075
        %v1164 = vpop.f32.mrb[0].mxu0
        %v1165 = vadd.f32 %v1071, %v1164
        %v1166 = vpop.f32.mrb[0].mxu0
        %1167 = vmatprep.mubr.f32.mxu0 0.0
        %1168 = vmatmul.mubr.f32.gmra.mrb[0].mxu0 %v1078
        %v1169 = vpop.f32.mrb[0].mxu0
        %v1170 = vadd.f32 %v1071, %v1169
        %v1171 = vpop.f32.mrb[0].mxu0
        %1172 = vmatprep.mubr.f32.mxu0 0.0
        %1173 = vmatmul.mubr.f32.gmra.mrb[0].mxu0 %v1081
        %v1174 = vpop.f32.mrb[0].mxu0
        %v1175 = vadd.f32 %v1071, %v1174
        %v1176 = vpop.f32.mrb[0].mxu0
        %1177 = vmatprep.mubr.f32.mxu0 0.0
        %1178 = vmatmul.mubr.f32.gmra.mrb[0].mxu0 %v1084
        %v1179 = vpop.f32.mrb[0].mxu0
        %v1180 = vadd.f32 %v1071, %v1179
        %v1181 = vpop.f32.mrb[0].mxu0
        %1182 = vmatprep.mubr.f32.mxu0 0.0
        %1183 = vmatmul.mubr.f32.gmra.mrb[0].mxu0 %v1087
        %v1184 = vpop.f32.mrb[0].mxu0
        %v1185 = vadd.f32 %v1071, %v1184
        %v1186 = vpop.f32.mrb[0].mxu0
        %1187 = vmatprep.mubr.f32.mxu0 0.0
        %1188 = vmatmul.mubr.f32.gmra.mrb[0].mxu0 %v1090
        %v1189 = vpop.f32.mrb[0].mxu0
        %v1190 = vadd.f32 %v1071, %v1189
        %v1191 = vpop.f32.mrb[0].mxu0
        %1192 = vmatprep.mubr.f32.mxu0 0.0
        %1193 = vmatmul.mubr.f32.gmra.mrb[0].mxu0 %v1093
        %v1194 = vpop.f32.mrb[0].mxu0
        %v1195 = vadd.f32 %v1071, %v1194
        %v1196 = vpop.f32.mrb[0].mxu0
        %1197 = vmatprep.mubr.f32.mxu0 0.0
        %1198 = vmatmul.mubr.f32.gmra.mrb[0].mxu0 %v1096
        %v1199 = vpop.f32.mrb[0].mxu0
        %v1200 = vadd.f32 %v1071, %v1199
        %v1201 = vpop.f32.mrb[0].mxu0
        %1202 = vdwg.mxu0
        %v1203 = vmul.f32 %v1165, 0.5
        %v1204 = vmul.f32 %v1170, 0.5
        %v1205 = vmul.f32 %v1175, 0.5
        %v1206 = vmul.f32 %v1180, 0.5
        %v1207 = vmul.f32 %v1185, 0.5
        %v1208 = vmul.f32 %v1190, 0.5
        %v1209 = vmul.f32 %v1195, 0.5
        %v1210 = vmul.f32 %v1200, 0.5
        %v1211 = vmul.f32 %v1165, 0.70710677
        %v1212 = vmul.f32 %v1170, 0.70710677
        %v1213 = vmul.f32 %v1175, 0.70710677
        %v1214 = vmul.f32 %v1180, 0.70710677
        %v1215 = vmul.f32 %v1185, 0.70710677
        %v1216 = vmul.f32 %v1190, 0.70710677
        %v1217 = vmul.f32 %v1195, 0.70710677
        %v1218 = vmul.f32 %v1200, 0.70710677
        %v1219 = verf.f32.pop %v1211
        %v1220 = verf.f32.pop %v1212
        %v1221 = verf.f32.pop %v1213
        %v1222 = verf.f32.pop %v1214
        %v1223 = verf.f32.pop %v1215
        %v1224 = verf.f32.pop %v1216
        %v1225 = verf.f32.pop %v1217
        %v1226 = verf.f32.pop %v1218
        %v1227 = vadd.f32 %v1219, 1.0
        %v1228 = vadd.f32 %v1220, 1.0
        %v1229 = vadd.f32 %v1221, 1.0
        %v1230 = vadd.f32 %v1222, 1.0
        %v1231 = vadd.f32 %v1223, 1.0
        %v1232 = vadd.f32 %v1224, 1.0
        %v1233 = vadd.f32 %v1225, 1.0
        %v1234 = vadd.f32 %v1226, 1.0
        %v1235 = vmul.f32 %v1203, %v1227
        %v1236 = vmul.f32 %v1204, %v1228
        %v1237 = vmul.f32 %v1205, %v1229
        %v1238 = vmul.f32 %v1206, %v1230
        %v1239 = vmul.f32 %v1207, %v1231
        %v1240 = vmul.f32 %v1208, %v1232
        %v1241 = vmul.f32 %v1209, %v1233
        %v1242 = vmul.f32 %v1210, %v1234
        %v1243 = vld [vmem:[%s6] sm:$0xff]
        %v1244 = vld [vmem:[%s6 + $0x8] sm:$0xff]
        %v1245 = vld [vmem:[%s7] sm:$0x1]
        %v1247 = vlaneseq
        %v1248 = vshrl.u32 %v1247, 7
        %v1249 = vsub.s32 0, %v1248
        %v1250 = vrot.slane %v1245, %v1249
        %vm1252 = vcmask 130048
        %v1254 = vsel %vm1252, %v1235, 0
        %v1257 = vsel %vm1252, %v1236, 0
        %v1260 = vsel %vm1252, %v1237, 0
        %v1263 = vsel %vm1252, %v1238, 0
        %v1266 = vsel %vm1252, %v1239, 0
        %v1269 = vsel %vm1252, %v1240, 0
        %v1272 = vsel %vm1252, %v1241, 0
        %v1275 = vsel %vm1252, %v1242, 0
        %1277 = vmatprep.subr.mxu0 0.0
        %1278 = vmatpush1.msra.mxu0 %v1243
        %1279 = vmatprep.subr.mxu0 0.0
        %1280 = vmatpush1.msra.mxu0 %v1244
        %1281 = vmatprep.subr.mxu0 0.0
        %1282 = vmatpush1.msra.mxu0 0.0
        %1283 = vmatprep.subr.mxu0 0.0
        %1284 = vmatpush1.msra.mxu0 0.0
        %1285 = vmatprep.subr.mxu0 0.0
        %1286 = vmatpush1.msra.mxu0 0.0
        %1287 = vmatprep.subr.mxu0 0.0
        %1288 = vmatpush1.msra.mxu0 0.0
        %1289 = vmatprep.subr.mxu0 0.0
        %1290 = vmatpush1.msra.mxu0 0.0
        %1291 = vmatprep.subr.mxu0 0.0
        %1292 = vmatpush1.msra.mxu0 0.0
        %1293 = vmatprep.subr.mxu0 0.0
        %1294 = vmatpush1.msra.mxu0 0.0
        %1295 = vmatprep.subr.mxu0 0.0
        %1296 = vmatpush1.msra.mxu0 0.0
        %1297 = vmatprep.subr.mxu0 0.0
        %1298 = vmatpush1.msra.mxu0 0.0
        %1299 = vmatprep.subr.mxu0 0.0
        %1300 = vmatpush1.msra.mxu0 0.0
        %1301 = vmatprep.subr.mxu0 0.0
        %1302 = vmatpush1.msra.mxu0 0.0
        %1303 = vmatprep.subr.mxu0 0.0
        %1304 = vmatpush1.msra.mxu0 0.0
        %1305 = vmatprep.subr.mxu0 0.0
        %1306 = vmatpush1.msra.mxu0 0.0
        %1307 = vmatprep.subr.mxu0 0.0
        %1308 = vmatpush1.msra.mxu0 0.0
        %1309 = vmatprep.subr.mxu0 0.0
        %1310 = vmatpush1.msra.mxu0 0.0
        %1311 = vmatprep.subr.mxu0 0.0
        %1312 = vmatpush1.msra.mxu0 0.0
        %1313 = vmatprep.subr.mxu0 0.0
        %1314 = vmatpush1.msra.mxu0 0.0
        %1315 = vmatprep.subr.mxu0 0.0
        %1316 = vmatpush1.msra.mxu0 0.0
        %1317 = vmatprep.subr.mxu0 0.0
        %1318 = vmatpush1.msra.mxu0 0.0
        %1319 = vmatprep.subr.mxu0 0.0
        %1320 = vmatpush1.msra.mxu0 0.0
        %1321 = vmatprep.subr.mxu0 0.0
        %1322 = vmatpush1.msra.mxu0 0.0
        %1323 = vmatprep.subr.mxu0 0.0
        %1324 = vmatpush1.msra.mxu0 0.0
        %1325 = vmatprep.subr.mxu0 0.0
        %1326 = vmatpush1.msra.mxu0 0.0
        %1327 = vmatprep.subr.mxu0 0.0
        %1328 = vmatpush1.msra.mxu0 0.0
        %1329 = vmatprep.subr.mxu0 0.0
        %1330 = vmatpush1.msra.mxu0 0.0
        %1331 = vmatprep.subr.mxu0 0.0
        %1332 = vmatpush1.msra.mxu0 0.0
        %1333 = vmatprep.subr.mxu0 0.0
        %1334 = vmatpush1.msra.mxu0 0.0
        %1335 = vmatprep.subr.mxu0 0.0
        %1336 = vmatpush1.msra.mxu0 0.0
        %1337 = vmatprep.subr.mxu0 0.0
        %1338 = vmatpush1.msra.mxu0 0.0
        %1339 = vmatprep.subr.mxu0 0.0
        %1340 = vmatpush1.msra.mxu0 0.0
        %1341 = vmatprep.mubr.f32.mxu0 0.0
        %1342 = vmatmul.mubr.f32.gmra.mrb[0].mxu0 %v1254
        %v1343 = vpop.f32.mrb[0].mxu0
        %v1344 = vadd.f32 %v1250, %v1343
        %v1345 = vpop.f32.mrb[0].mxu0
        %1346 = vmatprep.mubr.f32.mxu0 0.0
        %1347 = vmatmul.mubr.f32.gmra.mrb[0].mxu0 %v1257
        %v1348 = vpop.f32.mrb[0].mxu0
        %v1349 = vadd.f32 %v1250, %v1348
        %v1350 = vpop.f32.mrb[0].mxu0
        %1351 = vmatprep.mubr.f32.mxu0 0.0
        %1352 = vmatmul.mubr.f32.gmra.mrb[0].mxu0 %v1260
        %v1353 = vpop.f32.mrb[0].mxu0
        %v1354 = vadd.f32 %v1250, %v1353
        %v1355 = vpop.f32.mrb[0].mxu0
        %1356 = vmatprep.mubr.f32.mxu0 0.0
        %1357 = vmatmul.mubr.f32.gmra.mrb[0].mxu0 %v1263
        %v1358 = vpop.f32.mrb[0].mxu0
        %v1359 = vadd.f32 %v1250, %v1358
        %v1360 = vpop.f32.mrb[0].mxu0
        %1361 = vmatprep.mubr.f32.mxu0 0.0
        %1362 = vmatmul.mubr.f32.gmra.mrb[0].mxu0 %v1266
        %v1363 = vpop.f32.mrb[0].mxu0
        %v1364 = vadd.f32 %v1250, %v1363
        %v1365 = vpop.f32.mrb[0].mxu0
        %1366 = vmatprep.mubr.f32.mxu0 0.0
        %1367 = vmatmul.mubr.f32.gmra.mrb[0].mxu0 %v1269
        %v1368 = vpop.f32.mrb[0].mxu0
        %v1369 = vadd.f32 %v1250, %v1368
        %v1370 = vpop.f32.mrb[0].mxu0
        %1371 = vmatprep.mubr.f32.mxu0 0.0
        %1372 = vmatmul.mubr.f32.gmra.mrb[0].mxu0 %v1272
        %v1373 = vpop.f32.mrb[0].mxu0
        %v1374 = vadd.f32 %v1250, %v1373
        %v1375 = vpop.f32.mrb[0].mxu0
        %1376 = vmatprep.mubr.f32.mxu0 0.0
        %1377 = vmatmul.mubr.f32.gmra.mrb[0].mxu0 %v1275
        %v1378 = vpop.f32.mrb[0].mxu0
        %v1379 = vadd.f32 %v1250, %v1378
        %v1380 = vpop.f32.mrb[0].mxu0
        %1381 = vdwg.mxu0
        %v1382 = vadd.f32 %v1057, %v1344
        %v1383 = vadd.f32 %v1058, %v1349
        %v1384 = vadd.f32 %v1059, %v1354
        %v1385 = vadd.f32 %v1060, %v1359
        %v1386 = vadd.f32 %v1061, %v1364
        %v1387 = vadd.f32 %v1062, %v1369
        %v1388 = vadd.f32 %v1063, %v1374
        %v1389 = vadd.f32 %v1064, %v1379
        %1390 = vst.msk [vmem:[%s338] sm:$0xff] %vm1073, %v1382
        %1391 = vst.msk [vmem:[%s338 + $0x8] sm:$0xff] %vm1073, %v1383
        %1392 = vst.msk [vmem:[%s338 + $0x10] sm:$0xff] %vm1073, %v1384
        %1393 = vst.msk [vmem:[%s338 + $0x18] sm:$0xff] %vm1073, %v1385
        %1394 = vst.msk [vmem:[%s338 + $0x20] sm:$0xff] %vm1073, %v1386
        %1395 = vst.msk [vmem:[%s338 + $0x28] sm:$0xff] %vm1073, %v1387
        %1396 = vst.msk [vmem:[%s338 + $0x30] sm:$0xff] %vm1073, %v1388
        %1397 = vst.msk [vmem:[%s338 + $0x38] sm:$0xff] %vm1073, %v1389
      $region64: #{down_block.1} parent=51 // pred_fallthru
        _
      %s1398 = smul.u32 %s25, %s26
      %s1399 = smul.u32 8, %s1398
      %p1400 = scmp.lt.s32.totalorder %s24, 1
      %s1401 = scalar_select %p1400, %s24, 1
      %p1402 = scmp.lt.s32.totalorder %s1399, 7
      %s1403 = scalar_select %p1402, %s1399, 7
      %s1404 = smul.addr %s1401, 8
      %s1405 = sadd.s32 %s1403, %s1404
      %s1406 = smul.addr %s1405, 8
      %s1407 = scalar_lea.vmem %s8, %s1406
      // Predicated region
      $region65: #{down_block.1} parent=51 // pred_check
        %p1408 = pneg %p233
      $region66: #{down_block.1} parent=51 // pred_check_branch
        %1410 = sbr.rel (%p1408) target = $region68
      $region67: #{down_block.1} parent=51 // pred_region
        %s1411 = smul.u32 %s25, %s26
        %s1412 = smul.u32 8, %s1411
      $region68: #{down_block.1} parent=51 // pred_fallthru
        _
    $region52: #{down_block.1} parent=5 // pred_fallthru
      _
    %p1413 = scmp.le.s32.totalorder 2, %s14
    // Predicated region
    $region69: #{down_block.1} parent=5 // pred_check
      %p1414 = pneg %p1413
    $region70: #{down_block.1} parent=5 // pred_check_branch
      %1416 = sbr.rel (%p1414) target = $region72
    $region71: #{down_block.1} parent=5 // pred_region
      %s1417 = ssub.s32 %s14, 2
      // Predicated region
      $region73: #{down_block.1} parent=71 // pred_check
        %p1418 = pneg %p239
      $region74: #{down_block.1} parent=71 // pred_check_branch
        %1420 = sbr.rel (%p1418) target = $region76
      $region75: #{down_block.1} parent=71 // pred_region
        %s1421 = smul.u32 %s28, %s29
        %s1422 = smul.u32 8, %s1421
        %p1423 = scmp.lt.s32.totalorder %s27, 1
        %s1424 = scalar_select %p1423, %s27, 1
        %p1425 = scmp.lt.s32.totalorder %s1422, 7
        %s1426 = scalar_select %p1425, %s1422, 7
        %s1427 = smul.addr %s1424, 8
        %s1428 = sadd.s32 %s1426, %s1427
        %s1429 = smul.addr %s1428, 8
        %s1430 = scalar_lea.vmem %s8, %s1429
      $region76: #{down_block.1} parent=71 // pred_fallthru
        _
    $region72: #{down_block.1} parent=5 // pred_fallthru
      _
  $region6: #{down_block.1} parent=0 // loop_footer
    %s18 = sadd.s32 1, %s14
  $region7: #{down_block.1} parent=0 // loop_footer_branch
    %13 = sbr.rel target = $region3
  $region8: #{down_block.1} parent=0 // loop_exit
    _

</llo_original>
